<compile_context>
chip_gen: v7x
topology: tpu7x:2x2x1
jax: 0.10.0
libtpu: 0.0.40
codegen_flags: <defaults>
</compile_context>

<pallas_src>
import functools

import jax
import jax.numpy as jnp
from jax.experimental import pallas as pl
from jax.experimental.pallas import tpu as pltpu


def _round_up(x, m):
    return ((x + m - 1) // m) * m


def rnnnet_kernel(emb_ref, wih_ref, whh_ref, b_ref, wlin_ref, sel_ref,
                  blin_ref, out_ref, xp_ref):
    """Per grid step (lane-packed, G batch groups, GH = G*H):
         emb_ref : (S, TBq, G*E) f32/bf16  packed, time-major embeddings
         wih_ref : (G*E, GH)     f32/bf16  block-diagonal input weight
         whh_ref : (GH, GH)      f32       block-diagonal recurrent weight
         b_ref   : (1, GH)       f32       tiled RNN bias (b_ih + b_hh)
         wlin_ref: (S, GH)       f32       tiled per-step linear-head rows
         sel_ref : (GH, G)       f32       segmented lane-sum selector
         blin_ref: (1, 1)        f32       linear-head bias (SMEM scalar)
         out_ref : (TBq, G)      f32       sigmoid(linear(flatten(rnn_out)))
         xp_ref  : (S, TBq, GH)  f32       VMEM scratch for the projection
    """
    S = emb_ref.shape[0]

    # --- fused input projection: MXU work entirely off the serial h-chain ---
    wih = wih_ref[...]
    b = b_ref[...]
    for t in range(S):                       # S is static & small
        xp_ref[t] = jnp.dot(emb_ref[t], wih,
                            preferred_element_type=jnp.float32) + b

    whh = whh_ref[...]                       # (GH, GH), stays resident
    wlin = wlin_ref[...]                     # (S, GH): 1 vreg for S=8

    # --- recurrence: only tanh(xp[t] + h @ W_hh_blockdiag) is serial ---------
    # t = 0: h_{-1} = 0  =>  h_0 = tanh(xp[0])  (skip the zero matmul).
    h = jnp.tanh(xp_ref[0])                  # (TBq, GH)
    acc = h * wlin[0:1, :]                   # VPU head accumulate (off-chain)
    # Fully unrolled: fine for S <= ~8.  For much larger S, switch to
    # lax.fori_loop / a time grid axis to bound vreg pressure.
    for t in range(1, S):
        h = jnp.tanh(xp_ref[t]
                     + jnp.dot(h, whh, preferred_element_type=jnp.float32))
        acc = acc + h * wlin[t:t + 1, :]

    # --- head: segmented lane-sum per batch group, bias (SMEM), sigmoid ------
    lin = jnp.dot(acc, sel_ref[...], preferred_element_type=jnp.float32)
    out_ref[...] = jax.nn.sigmoid(lin + blin_ref[0, 0])


@functools.partial(jax.jit, static_argnames=("use_bf16_matmul",))
def rnnnet_forward(tokens, params, *, use_bf16_matmul=False):
    """tokens: (B, S) int32.
    params:
      embedding (V, E), w_ih (E, H), w_hh (H, H), b (1, H) = b_ih + b_hh,
      w_lin (S*H, 1), b_lin (1, 1).   Returns (B, 1) float32."""
    emb_table = params["embedding"]          # (V, E)
    w_ih = params["w_ih"]                    # (E, H)
    w_hh = params["w_hh"]                    # (H, H)
    b = params["b"]                          # (1, H)
    w_lin = params["w_lin"]                  # (S*H, 1)
    b_lin = params["b_lin"]                  # (1, 1)

    B, S = tokens.shape
    E = w_ih.shape[0]
    H = w_hh.shape[0]

    # ---- batch tiling / lane-packing geometry --------------------------------
    G = (128 // H) if (128 % H == 0) else 1  # batch groups packed along lanes
    GE, GH = G * E, G * H
    GRAN = 8 * G                             # G lane-groups x 8 sublanes
    B_r = _round_up(B, GRAN)
    if B_r >= 2 * GRAN:
        # Large tile to amortize per-grid-step overhead, but keep grid_b >= 2
        # so the "parallel" batch axis can shard across v7x's two TensorCores.
        TB = min(512, _round_up(pl.cdiv(B_r, 2), GRAN))
    else:
        TB = B_r
    grid_b = pl.cdiv(B_r, TB)
    B_pad = grid_b * TB
    TBq = TB // G                            # packed rows per grid step

    # ---- token-side packing (tiny int32 passes; no float relayout in HBM) ----
    # Packed order: block i, group g, row r  <->  padded batch index
    #               i*TB + g*TBq + r.
    tok = jnp.pad(tokens.astype(jnp.int32), ((0, B_pad - B), (0, 0)))
    tok = tok.reshape(grid_b, G, TBq, S)
    tok = jnp.transpose(tok, (3, 0, 2, 1))               # (S, grid_b, TBq, G)
    tok = tok.reshape(S, grid_b * TBq, G)

    # Embedding gather stays in XLA glue (data-dependent HBM gather); it emits
    # the kernel layout directly.  Cast the table BEFORE the gather on the
    # bf16 path to halve gather + kernel-input DMA bytes (safe on v5e too).
    table = emb_table.astype(jnp.bfloat16 if use_bf16_matmul else jnp.float32)
    emb = jnp.take(table, tok, axis=0)                   # (S, grid_b*TBq, G, E)
    emb = emb.reshape(S, grid_b * TBq, GE)

    # ---- packed / block-diagonal weights (tiny, one-time) --------------------
    eye_g = jnp.eye(G, dtype=jnp.float32)
    w_ih_bd = jnp.kron(eye_g, w_ih.astype(jnp.float32))          # (GE, GH)
    if use_bf16_matmul:
        w_ih_bd = w_ih_bd.astype(jnp.bfloat16)
    w_hh_bd = jnp.kron(eye_g, w_hh.astype(jnp.float32))          # (GH, GH) f32
    b_pk = jnp.tile(b.astype(jnp.float32), (1, G))               # (1, GH)
    wlin_pk = jnp.tile(w_lin.reshape(S, H).astype(jnp.float32), (1, G))  # (S,GH)
    sel = jnp.kron(eye_g, jnp.ones((H, 1), jnp.float32))         # (GH, G)
    b_lin_f = b_lin.astype(jnp.float32).reshape(1, 1)

    out = pl.pallas_call(
        rnnnet_kernel,
        out_shape=jax.ShapeDtypeStruct((grid_b * TBq, G), jnp.float32),
        grid_spec=pltpu.PrefetchScalarGridSpec(
            num_scalar_prefetch=0,
            grid=(grid_b,),
            in_specs=[
                pl.BlockSpec((S, TBq, GE), lambda i: (0, i, 0)),   # emb tile
                pl.BlockSpec((GE, GH), lambda i: (0, 0)),          # W_ih (bd)
                pl.BlockSpec((GH, GH), lambda i: (0, 0)),          # W_hh (bd)
                pl.BlockSpec((1, GH), lambda i: (0, 0)),           # bias
                pl.BlockSpec((S, GH), lambda i: (0, 0)),           # W_lin rows
                pl.BlockSpec((GH, G), lambda i: (0, 0)),           # selector
                pl.BlockSpec(memory_space=pltpu.MemorySpace.SMEM), # b_lin
            ],
            out_specs=pl.BlockSpec((TBq, G), lambda i: (i, 0)),
            scratch_shapes=[pltpu.VMEM((S, TBq, GH), jnp.float32)],
        ),
        compiler_params=pltpu.CompilerParams(
            # Batch axis is fully independent -> shardable across v7x's 2 TCs.
            dimension_semantics=("parallel",)),
    )(emb, w_ih_bd, w_hh_bd, b_pk, wlin_pk, sel, b_lin_f)

    # ---- unpack (tiny): (grid_b*TBq, G) -> (B, 1) -----------------------------
    out = out.reshape(grid_b, TBq, G)
    out = jnp.transpose(out, (0, 2, 1)).reshape(B_pad, 1)
    return out[:B]


def rnnnet_reference(tokens, params):
    """Pure-JAX reference mirroring the PyTorch forward (f32, highest precision)."""
    hp = jax.lax.Precision.HIGHEST
    emb = jnp.take(params["embedding"].astype(jnp.float32), tokens, axis=0)
    B, S, _ = emb.shape
    H = params["w_hh"].shape[0]
    h = jnp.zeros((B, H), jnp.float32)
    outs = []
    for t in range(S):
        h = jnp.tanh(jnp.dot(emb[:, t, :], params["w_ih"], precision=hp)
                     + jnp.dot(h, params["w_hh"], precision=hp)
                     + params["b"])
        outs.append(h)
    rnn_out = jnp.stack(outs, axis=1)                    # (B, S, H)
    flat = rnn_out.reshape(B, S * H)
    lin = jnp.dot(flat, params["w_lin"], precision=hp) + params["b_lin"]
    return jax.nn.sigmoid(lin)


if __name__ == "__main__":
    # Small, deterministic config consistent with the module's __init__.
    vocab_size = 100
    emb_size = 16
    hidden_dim = 32
    seq_len = 8
    batch_size = 2

    key = jax.random.PRNGKey(0)
    k_emb, k_wih, k_whh, k_bih, k_bhh, k_wl, k_bl, k_x = jax.random.split(key, 8)

    params = {
        "embedding": jax.random.normal(k_emb, (vocab_size, emb_size), jnp.float32) * 0.1,
        "w_ih": jax.random.normal(k_wih, (emb_size, hidden_dim), jnp.float32) * 0.1,
        "w_hh": jax.random.normal(k_whh, (hidden_dim, hidden_dim), jnp.float32) * 0.1,
        "b": (jax.random.normal(k_bih, (1, hidden_dim), jnp.float32) * 0.1
              + jax.random.normal(k_bhh, (1, hidden_dim), jnp.float32) * 0.1),
        "w_lin": jax.random.normal(k_wl, (seq_len * hidden_dim, 1), jnp.float32) * 0.1,
        "b_lin": jax.random.normal(k_bl, (1, 1), jnp.float32) * 0.1,
    }

    tokens = jax.random.randint(k_x, (batch_size, seq_len), 0, vocab_size, jnp.int32)

    ref = jax.block_until_ready(rnnnet_reference(tokens, params))

    # f32 path: must match the reference tightly.
    out = jax.block_until_ready(rnnnet_forward(tokens, params))
    assert out.shape == (batch_size, 1)
    assert jnp.allclose(out, ref, atol=1e-4, rtol=1e-4), (out, ref)

    # bf16-operand projection path (safe on v5e/v6e/v7x; f32 accumulate and
    # f32 in-kernel elementwise math) -> loose tolerance only.
    out_bf16 = jax.block_until_ready(
        rnnnet_forward(tokens, params, use_bf16_matmul=True))
    assert jnp.allclose(out_bf16, ref, atol=2e-2, rtol=2e-2), (out_bf16, ref)

    print("KERNEL_OK")
</pallas_src>

<mosaic_0001>
module attributes {stable_mosaic.version = 11 : i64} {
  func.func @rnnnet_kernel(%arg0: i32, %arg1: memref<8x8x64xf32, #tpu.memory_space<vmem>>, %arg2: memref<64x128xf32, #tpu.memory_space<vmem>>, %arg3: memref<128x128xf32, #tpu.memory_space<vmem>>, %arg4: memref<1x128xf32, #tpu.memory_space<vmem>>, %arg5: memref<8x128xf32, #tpu.memory_space<vmem>>, %arg6: memref<128x4xf32, #tpu.memory_space<vmem>>, %arg7: memref<1x1xf32, #tpu.memory_space<smem>>, %arg8: memref<8x4xf32, #tpu.memory_space<vmem>>, %arg9: memref<8x8x128xf32, #tpu.memory_space<vmem>>) attributes {dimension_semantics = [#tpu.dimension_semantics<parallel>], iteration_bounds = array<i64: 1>, scalar_prefetch = 0 : i64, scratch_operands = 1 : i64, tpu.core_type = #tpu.core_type<tc>, window_params = [{transform_indices = @transform_0, window_bounds = array<i64: 8, 8, 64>}, {pipeline_mode = #tpu.pipeline_mode<synchronous>, transform_indices = @transform_1, window_bounds = array<i64: 64, 128>}, {pipeline_mode = #tpu.pipeline_mode<synchronous>, transform_indices = @transform_2, window_bounds = array<i64: 128, 128>}, {pipeline_mode = #tpu.pipeline_mode<synchronous>, transform_indices = @transform_3, window_bounds = array<i64: 1, 128>}, {pipeline_mode = #tpu.pipeline_mode<synchronous>, transform_indices = @transform_4, window_bounds = array<i64: 8, 128>}, {pipeline_mode = #tpu.pipeline_mode<synchronous>, transform_indices = @transform_5, window_bounds = array<i64: 128, 4>}, {transform_indices = @transform_6, window_bounds = array<i64: 1, 1>}, {transform_indices = @transform_7, window_bounds = array<i64: 8, 4>}]} {
    %c0 = arith.constant 0 : index
    %c0_0 = arith.constant 0 : index
    %0 = vector.load %arg2[%c0, %c0_0] : memref<64x128xf32, #tpu.memory_space<vmem>>, vector<64x128xf32>
    %c0_1 = arith.constant 0 : index
    %c0_2 = arith.constant 0 : index
    %1 = vector.load %arg4[%c0_1, %c0_2] : memref<1x128xf32, #tpu.memory_space<vmem>>, vector<1x128xf32>
    %c0_3 = arith.constant 0 : index
    %c0_4 = arith.constant 0 : index
    %c0_5 = arith.constant 0 : index
    %2 = vector.load %arg1[%c0_3, %c0_4, %c0_5] : memref<8x8x64xf32, #tpu.memory_space<vmem>>, vector<1x8x64xf32>
    %3 = vector.shape_cast %2 : vector<1x8x64xf32> to vector<8x64xf32>
    %cst = arith.constant dense<0.000000e+00> : vector<8x128xf32>
    %4 = tpu.matmul %3, %0, %cst {dimension_numbers = #tpu.dot_dimension_numbers<[1], [0], [0], [1], [0, 0, 1, 1], [], []>} : vector<8x64xf32>, vector<64x128xf32>, vector<8x128xf32> -> vector<8x128xf32>
    %5 = vector.broadcast %1 : vector<1x128xf32> to vector<8x128xf32>
    %6 = arith.addf %4, %5 : vector<8x128xf32>
    %c0_6 = arith.constant 0 : index
    %c0_7 = arith.constant 0 : index
    %c0_8 = arith.constant 0 : index
    %7 = vector.load %arg9[%c0_6, %c0_7, %c0_8] : memref<8x8x128xf32, #tpu.memory_space<vmem>>, vector<1x8x128xf32>
    %8 = vector.shape_cast %7 : vector<1x8x128xf32> to vector<8x128xf32>
    %9 = vector.shape_cast %6 : vector<8x128xf32> to vector<1x8x128xf32>
    tpu.vector_store %arg9[%c0_6, %c0_7, %c0_8], %9 {strides = array<i32>} : memref<8x8x128xf32, #tpu.memory_space<vmem>>, vector<1x8x128xf32>,
    %c1 = arith.constant 1 : index
    %c0_9 = arith.constant 0 : index
    %c0_10 = arith.constant 0 : index
    %10 = vector.load %arg1[%c1, %c0_9, %c0_10] : memref<8x8x64xf32, #tpu.memory_space<vmem>>, vector<1x8x64xf32>
    %11 = vector.shape_cast %10 : vector<1x8x64xf32> to vector<8x64xf32>
    %cst_11 = arith.constant dense<0.000000e+00> : vector<8x128xf32>
    %12 = tpu.matmul %11, %0, %cst_11 {dimension_numbers = #tpu.dot_dimension_numbers<[1], [0], [0], [1], [0, 0, 1, 1], [], []>} : vector<8x64xf32>, vector<64x128xf32>, vector<8x128xf32> -> vector<8x128xf32>
    %13 = vector.broadcast %1 : vector<1x128xf32> to vector<8x128xf32>
    %14 = arith.addf %12, %13 : vector<8x128xf32>
    %c1_12 = arith.constant 1 : index
    %c0_13 = arith.constant 0 : index
    %c0_14 = arith.constant 0 : index
    %15 = vector.load %arg9[%c1_12, %c0_13, %c0_14] : memref<8x8x128xf32, #tpu.memory_space<vmem>>, vector<1x8x128xf32>
    %16 = vector.shape_cast %15 : vector<1x8x128xf32> to vector<8x128xf32>
    %17 = vector.shape_cast %14 : vector<8x128xf32> to vector<1x8x128xf32>
    tpu.vector_store %arg9[%c1_12, %c0_13, %c0_14], %17 {strides = array<i32>} : memref<8x8x128xf32, #tpu.memory_space<vmem>>, vector<1x8x128xf32>,
    %c2 = arith.constant 2 : index
    %c0_15 = arith.constant 0 : index
    %c0_16 = arith.constant 0 : index
    %18 = vector.load %arg1[%c2, %c0_15, %c0_16] : memref<8x8x64xf32, #tpu.memory_space<vmem>>, vector<1x8x64xf32>
    %19 = vector.shape_cast %18 : vector<1x8x64xf32> to vector<8x64xf32>
    %cst_17 = arith.constant dense<0.000000e+00> : vector<8x128xf32>
    %20 = tpu.matmul %19, %0, %cst_17 {dimension_numbers = #tpu.dot_dimension_numbers<[1], [0], [0], [1], [0, 0, 1, 1], [], []>} : vector<8x64xf32>, vector<64x128xf32>, vector<8x128xf32> -> vector<8x128xf32>
    %21 = vector.broadcast %1 : vector<1x128xf32> to vector<8x128xf32>
    %22 = arith.addf %20, %21 : vector<8x128xf32>
    %c2_18 = arith.constant 2 : index
    %c0_19 = arith.constant 0 : index
    %c0_20 = arith.constant 0 : index
    %23 = vector.load %arg9[%c2_18, %c0_19, %c0_20] : memref<8x8x128xf32, #tpu.memory_space<vmem>>, vector<1x8x128xf32>
    %24 = vector.shape_cast %23 : vector<1x8x128xf32> to vector<8x128xf32>
    %25 = vector.shape_cast %22 : vector<8x128xf32> to vector<1x8x128xf32>
    tpu.vector_store %arg9[%c2_18, %c0_19, %c0_20], %25 {strides = array<i32>} : memref<8x8x128xf32, #tpu.memory_space<vmem>>, vector<1x8x128xf32>,
    %c3 = arith.constant 3 : index
    %c0_21 = arith.constant 0 : index
    %c0_22 = arith.constant 0 : index
    %26 = vector.load %arg1[%c3, %c0_21, %c0_22] : memref<8x8x64xf32, #tpu.memory_space<vmem>>, vector<1x8x64xf32>
    %27 = vector.shape_cast %26 : vector<1x8x64xf32> to vector<8x64xf32>
    %cst_23 = arith.constant dense<0.000000e+00> : vector<8x128xf32>
    %28 = tpu.matmul %27, %0, %cst_23 {dimension_numbers = #tpu.dot_dimension_numbers<[1], [0], [0], [1], [0, 0, 1, 1], [], []>} : vector<8x64xf32>, vector<64x128xf32>, vector<8x128xf32> -> vector<8x128xf32>
    %29 = vector.broadcast %1 : vector<1x128xf32> to vector<8x128xf32>
    %30 = arith.addf %28, %29 : vector<8x128xf32>
    %c3_24 = arith.constant 3 : index
    %c0_25 = arith.constant 0 : index
    %c0_26 = arith.constant 0 : index
    %31 = vector.load %arg9[%c3_24, %c0_25, %c0_26] : memref<8x8x128xf32, #tpu.memory_space<vmem>>, vector<1x8x128xf32>
    %32 = vector.shape_cast %31 : vector<1x8x128xf32> to vector<8x128xf32>
    %33 = vector.shape_cast %30 : vector<8x128xf32> to vector<1x8x128xf32>
    tpu.vector_store %arg9[%c3_24, %c0_25, %c0_26], %33 {strides = array<i32>} : memref<8x8x128xf32, #tpu.memory_space<vmem>>, vector<1x8x128xf32>,
    %c4 = arith.constant 4 : index
    %c0_27 = arith.constant 0 : index
    %c0_28 = arith.constant 0 : index
    %34 = vector.load %arg1[%c4, %c0_27, %c0_28] : memref<8x8x64xf32, #tpu.memory_space<vmem>>, vector<1x8x64xf32>
    %35 = vector.shape_cast %34 : vector<1x8x64xf32> to vector<8x64xf32>
    %cst_29 = arith.constant dense<0.000000e+00> : vector<8x128xf32>
    %36 = tpu.matmul %35, %0, %cst_29 {dimension_numbers = #tpu.dot_dimension_numbers<[1], [0], [0], [1], [0, 0, 1, 1], [], []>} : vector<8x64xf32>, vector<64x128xf32>, vector<8x128xf32> -> vector<8x128xf32>
    %37 = vector.broadcast %1 : vector<1x128xf32> to vector<8x128xf32>
    %38 = arith.addf %36, %37 : vector<8x128xf32>
    %c4_30 = arith.constant 4 : index
    %c0_31 = arith.constant 0 : index
    %c0_32 = arith.constant 0 : index
    %39 = vector.load %arg9[%c4_30, %c0_31, %c0_32] : memref<8x8x128xf32, #tpu.memory_space<vmem>>, vector<1x8x128xf32>
    %40 = vector.shape_cast %39 : vector<1x8x128xf32> to vector<8x128xf32>
    %41 = vector.shape_cast %38 : vector<8x128xf32> to vector<1x8x128xf32>
    tpu.vector_store %arg9[%c4_30, %c0_31, %c0_32], %41 {strides = array<i32>} : memref<8x8x128xf32, #tpu.memory_space<vmem>>, vector<1x8x128xf32>,
    %c5 = arith.constant 5 : index
    %c0_33 = arith.constant 0 : index
    %c0_34 = arith.constant 0 : index
    %42 = vector.load %arg1[%c5, %c0_33, %c0_34] : memref<8x8x64xf32, #tpu.memory_space<vmem>>, vector<1x8x64xf32>
    %43 = vector.shape_cast %42 : vector<1x8x64xf32> to vector<8x64xf32>
    %cst_35 = arith.constant dense<0.000000e+00> : vector<8x128xf32>
    %44 = tpu.matmul %43, %0, %cst_35 {dimension_numbers = #tpu.dot_dimension_numbers<[1], [0], [0], [1], [0, 0, 1, 1], [], []>} : vector<8x64xf32>, vector<64x128xf32>, vector<8x128xf32> -> vector<8x128xf32>
    %45 = vector.broadcast %1 : vector<1x128xf32> to vector<8x128xf32>
    %46 = arith.addf %44, %45 : vector<8x128xf32>
    %c5_36 = arith.constant 5 : index
    %c0_37 = arith.constant 0 : index
    %c0_38 = arith.constant 0 : index
    %47 = vector.load %arg9[%c5_36, %c0_37, %c0_38] : memref<8x8x128xf32, #tpu.memory_space<vmem>>, vector<1x8x128xf32>
    %48 = vector.shape_cast %47 : vector<1x8x128xf32> to vector<8x128xf32>
    %49 = vector.shape_cast %46 : vector<8x128xf32> to vector<1x8x128xf32>
    tpu.vector_store %arg9[%c5_36, %c0_37, %c0_38], %49 {strides = array<i32>} : memref<8x8x128xf32, #tpu.memory_space<vmem>>, vector<1x8x128xf32>,
    %c6 = arith.constant 6 : index
    %c0_39 = arith.constant 0 : index
    %c0_40 = arith.constant 0 : index
    %50 = vector.load %arg1[%c6, %c0_39, %c0_40] : memref<8x8x64xf32, #tpu.memory_space<vmem>>, vector<1x8x64xf32>
    %51 = vector.shape_cast %50 : vector<1x8x64xf32> to vector<8x64xf32>
    %cst_41 = arith.constant dense<0.000000e+00> : vector<8x128xf32>
    %52 = tpu.matmul %51, %0, %cst_41 {dimension_numbers = #tpu.dot_dimension_numbers<[1], [0], [0], [1], [0, 0, 1, 1], [], []>} : vector<8x64xf32>, vector<64x128xf32>, vector<8x128xf32> -> vector<8x128xf32>
    %53 = vector.broadcast %1 : vector<1x128xf32> to vector<8x128xf32>
    %54 = arith.addf %52, %53 : vector<8x128xf32>
    %c6_42 = arith.constant 6 : index
    %c0_43 = arith.constant 0 : index
    %c0_44 = arith.constant 0 : index
    %55 = vector.load %arg9[%c6_42, %c0_43, %c0_44] : memref<8x8x128xf32, #tpu.memory_space<vmem>>, vector<1x8x128xf32>
    %56 = vector.shape_cast %55 : vector<1x8x128xf32> to vector<8x128xf32>
    %57 = vector.shape_cast %54 : vector<8x128xf32> to vector<1x8x128xf32>
    tpu.vector_store %arg9[%c6_42, %c0_43, %c0_44], %57 {strides = array<i32>} : memref<8x8x128xf32, #tpu.memory_space<vmem>>, vector<1x8x128xf32>,
    %c7 = arith.constant 7 : index
    %c0_45 = arith.constant 0 : index
    %c0_46 = arith.constant 0 : index
    %58 = vector.load %arg1[%c7, %c0_45, %c0_46] : memref<8x8x64xf32, #tpu.memory_space<vmem>>, vector<1x8x64xf32>
    %59 = vector.shape_cast %58 : vector<1x8x64xf32> to vector<8x64xf32>
    %cst_47 = arith.constant dense<0.000000e+00> : vector<8x128xf32>
    %60 = tpu.matmul %59, %0, %cst_47 {dimension_numbers = #tpu.dot_dimension_numbers<[1], [0], [0], [1], [0, 0, 1, 1], [], []>} : vector<8x64xf32>, vector<64x128xf32>, vector<8x128xf32> -> vector<8x128xf32>
    %61 = vector.broadcast %1 : vector<1x128xf32> to vector<8x128xf32>
    %62 = arith.addf %60, %61 : vector<8x128xf32>
    %c7_48 = arith.constant 7 : index
    %c0_49 = arith.constant 0 : index
    %c0_50 = arith.constant 0 : index
    %63 = vector.load %arg9[%c7_48, %c0_49, %c0_50] : memref<8x8x128xf32, #tpu.memory_space<vmem>>, vector<1x8x128xf32>
    %64 = vector.shape_cast %63 : vector<1x8x128xf32> to vector<8x128xf32>
    %65 = vector.shape_cast %62 : vector<8x128xf32> to vector<1x8x128xf32>
    tpu.vector_store %arg9[%c7_48, %c0_49, %c0_50], %65 {strides = array<i32>} : memref<8x8x128xf32, #tpu.memory_space<vmem>>, vector<1x8x128xf32>,
    %c0_51 = arith.constant 0 : index
    %c0_52 = arith.constant 0 : index
    %66 = vector.load %arg3[%c0_51, %c0_52] : memref<128x128xf32, #tpu.memory_space<vmem>>, vector<128x128xf32>
    %c0_53 = arith.constant 0 : index
    %c0_54 = arith.constant 0 : index
    %67 = vector.load %arg5[%c0_53, %c0_54] : memref<8x128xf32, #tpu.memory_space<vmem>>, vector<8x128xf32>
    %c0_55 = arith.constant 0 : index
    %c0_56 = arith.constant 0 : index
    %c0_57 = arith.constant 0 : index
    %68 = vector.load %arg9[%c0_55, %c0_56, %c0_57] : memref<8x8x128xf32, #tpu.memory_space<vmem>>, vector<1x8x128xf32>
    %69 = vector.shape_cast %68 : vector<1x8x128xf32> to vector<8x128xf32>
    %70 = math.tanh %69 : vector<8x128xf32>
    %71 = vector.extract_strided_slice %67 {offsets = [0, 0], sizes = [1, 128], strides = [1, 1]} : vector<8x128xf32> to vector<1x128xf32>
    %72 = vector.broadcast %71 : vector<1x128xf32> to vector<8x128xf32>
    %73 = arith.mulf %70, %72 : vector<8x128xf32>
    %c1_58 = arith.constant 1 : index
    %c0_59 = arith.constant 0 : index
    %c0_60 = arith.constant 0 : index
    %74 = vector.load %arg9[%c1_58, %c0_59, %c0_60] : memref<8x8x128xf32, #tpu.memory_space<vmem>>, vector<1x8x128xf32>
    %75 = vector.shape_cast %74 : vector<1x8x128xf32> to vector<8x128xf32>
    %cst_61 = arith.constant dense<0.000000e+00> : vector<8x128xf32>
    %76 = tpu.matmul %70, %66, %cst_61 {dimension_numbers = #tpu.dot_dimension_numbers<[1], [0], [0], [1], [0, 0, 1, 1], [], []>} : vector<8x128xf32>, vector<128x128xf32>, vector<8x128xf32> -> vector<8x128xf32>
    %77 = arith.addf %75, %76 : vector<8x128xf32>
    %78 = math.tanh %77 : vector<8x128xf32>
    %79 = vector.extract_strided_slice %67 {offsets = [1, 0], sizes = [1, 128], strides = [1, 1]} : vector<8x128xf32> to vector<1x128xf32>
    %80 = vector.broadcast %79 : vector<1x128xf32> to vector<8x128xf32>
    %81 = arith.mulf %78, %80 : vector<8x128xf32>
    %82 = arith.addf %73, %81 : vector<8x128xf32>
    %c2_62 = arith.constant 2 : index
    %c0_63 = arith.constant 0 : index
    %c0_64 = arith.constant 0 : index
    %83 = vector.load %arg9[%c2_62, %c0_63, %c0_64] : memref<8x8x128xf32, #tpu.memory_space<vmem>>, vector<1x8x128xf32>
    %84 = vector.shape_cast %83 : vector<1x8x128xf32> to vector<8x128xf32>
    %cst_65 = arith.constant dense<0.000000e+00> : vector<8x128xf32>
    %85 = tpu.matmul %78, %66, %cst_65 {dimension_numbers = #tpu.dot_dimension_numbers<[1], [0], [0], [1], [0, 0, 1, 1], [], []>} : vector<8x128xf32>, vector<128x128xf32>, vector<8x128xf32> -> vector<8x128xf32>
    %86 = arith.addf %84, %85 : vector<8x128xf32>
    %87 = math.tanh %86 : vector<8x128xf32>
    %88 = vector.extract_strided_slice %67 {offsets = [2, 0], sizes = [1, 128], strides = [1, 1]} : vector<8x128xf32> to vector<1x128xf32>
    %89 = vector.broadcast %88 : vector<1x128xf32> to vector<8x128xf32>
    %90 = arith.mulf %87, %89 : vector<8x128xf32>
    %91 = arith.addf %82, %90 : vector<8x128xf32>
    %c3_66 = arith.constant 3 : index
    %c0_67 = arith.constant 0 : index
    %c0_68 = arith.constant 0 : index
    %92 = vector.load %arg9[%c3_66, %c0_67, %c0_68] : memref<8x8x128xf32, #tpu.memory_space<vmem>>, vector<1x8x128xf32>
    %93 = vector.shape_cast %92 : vector<1x8x128xf32> to vector<8x128xf32>
    %cst_69 = arith.constant dense<0.000000e+00> : vector<8x128xf32>
    %94 = tpu.matmul %87, %66, %cst_69 {dimension_numbers = #tpu.dot_dimension_numbers<[1], [0], [0], [1], [0, 0, 1, 1], [], []>} : vector<8x128xf32>, vector<128x128xf32>, vector<8x128xf32> -> vector<8x128xf32>
    %95 = arith.addf %93, %94 : vector<8x128xf32>
    %96 = math.tanh %95 : vector<8x128xf32>
    %97 = vector.extract_strided_slice %67 {offsets = [3, 0], sizes = [1, 128], strides = [1, 1]} : vector<8x128xf32> to vector<1x128xf32>
    %98 = vector.broadcast %97 : vector<1x128xf32> to vector<8x128xf32>
    %99 = arith.mulf %96, %98 : vector<8x128xf32>
    %100 = arith.addf %91, %99 : vector<8x128xf32>
    %c4_70 = arith.constant 4 : index
    %c0_71 = arith.constant 0 : index
    %c0_72 = arith.constant 0 : index
    %101 = vector.load %arg9[%c4_70, %c0_71, %c0_72] : memref<8x8x128xf32, #tpu.memory_space<vmem>>, vector<1x8x128xf32>
    %102 = vector.shape_cast %101 : vector<1x8x128xf32> to vector<8x128xf32>
    %cst_73 = arith.constant dense<0.000000e+00> : vector<8x128xf32>
    %103 = tpu.matmul %96, %66, %cst_73 {dimension_numbers = #tpu.dot_dimension_numbers<[1], [0], [0], [1], [0, 0, 1, 1], [], []>} : vector<8x128xf32>, vector<128x128xf32>, vector<8x128xf32> -> vector<8x128xf32>
    %104 = arith.addf %102, %103 : vector<8x128xf32>
    %105 = math.tanh %104 : vector<8x128xf32>
    %106 = vector.extract_strided_slice %67 {offsets = [4, 0], sizes = [1, 128], strides = [1, 1]} : vector<8x128xf32> to vector<1x128xf32>
    %107 = vector.broadcast %106 : vector<1x128xf32> to vector<8x128xf32>
    %108 = arith.mulf %105, %107 : vector<8x128xf32>
    %109 = arith.addf %100, %108 : vector<8x128xf32>
    %c5_74 = arith.constant 5 : index
    %c0_75 = arith.constant 0 : index
    %c0_76 = arith.constant 0 : index
    %110 = vector.load %arg9[%c5_74, %c0_75, %c0_76] : memref<8x8x128xf32, #tpu.memory_space<vmem>>, vector<1x8x128xf32>
    %111 = vector.shape_cast %110 : vector<1x8x128xf32> to vector<8x128xf32>
    %cst_77 = arith.constant dense<0.000000e+00> : vector<8x128xf32>
    %112 = tpu.matmul %105, %66, %cst_77 {dimension_numbers = #tpu.dot_dimension_numbers<[1], [0], [0], [1], [0, 0, 1, 1], [], []>} : vector<8x128xf32>, vector<128x128xf32>, vector<8x128xf32> -> vector<8x128xf32>
    %113 = arith.addf %111, %112 : vector<8x128xf32>
    %114 = math.tanh %113 : vector<8x128xf32>
    %115 = vector.extract_strided_slice %67 {offsets = [5, 0], sizes = [1, 128], strides = [1, 1]} : vector<8x128xf32> to vector<1x128xf32>
    %116 = vector.broadcast %115 : vector<1x128xf32> to vector<8x128xf32>
    %117 = arith.mulf %114, %116 : vector<8x128xf32>
    %118 = arith.addf %109, %117 : vector<8x128xf32>
    %c6_78 = arith.constant 6 : index
    %c0_79 = arith.constant 0 : index
    %c0_80 = arith.constant 0 : index
    %119 = vector.load %arg9[%c6_78, %c0_79, %c0_80] : memref<8x8x128xf32, #tpu.memory_space<vmem>>, vector<1x8x128xf32>
    %120 = vector.shape_cast %119 : vector<1x8x128xf32> to vector<8x128xf32>
    %cst_81 = arith.constant dense<0.000000e+00> : vector<8x128xf32>
    %121 = tpu.matmul %114, %66, %cst_81 {dimension_numbers = #tpu.dot_dimension_numbers<[1], [0], [0], [1], [0, 0, 1, 1], [], []>} : vector<8x128xf32>, vector<128x128xf32>, vector<8x128xf32> -> vector<8x128xf32>
    %122 = arith.addf %120, %121 : vector<8x128xf32>
    %123 = math.tanh %122 : vector<8x128xf32>
    %124 = vector.extract_strided_slice %67 {offsets = [6, 0], sizes = [1, 128], strides = [1, 1]} : vector<8x128xf32> to vector<1x128xf32>
    %125 = vector.broadcast %124 : vector<1x128xf32> to vector<8x128xf32>
    %126 = arith.mulf %123, %125 : vector<8x128xf32>
    %127 = arith.addf %118, %126 : vector<8x128xf32>
    %c7_82 = arith.constant 7 : index
    %c0_83 = arith.constant 0 : index
    %c0_84 = arith.constant 0 : index
    %128 = vector.load %arg9[%c7_82, %c0_83, %c0_84] : memref<8x8x128xf32, #tpu.memory_space<vmem>>, vector<1x8x128xf32>
    %129 = vector.shape_cast %128 : vector<1x8x128xf32> to vector<8x128xf32>
    %cst_85 = arith.constant dense<0.000000e+00> : vector<8x128xf32>
    %130 = tpu.matmul %123, %66, %cst_85 {dimension_numbers = #tpu.dot_dimension_numbers<[1], [0], [0], [1], [0, 0, 1, 1], [], []>} : vector<8x128xf32>, vector<128x128xf32>, vector<8x128xf32> -> vector<8x128xf32>
    %131 = arith.addf %129, %130 : vector<8x128xf32>
    %132 = math.tanh %131 : vector<8x128xf32>
    %133 = vector.extract_strided_slice %67 {offsets = [7, 0], sizes = [1, 128], strides = [1, 1]} : vector<8x128xf32> to vector<1x128xf32>
    %134 = vector.broadcast %133 : vector<1x128xf32> to vector<8x128xf32>
    %135 = arith.mulf %132, %134 : vector<8x128xf32>
    %136 = arith.addf %127, %135 : vector<8x128xf32>
    %c0_86 = arith.constant 0 : index
    %c0_87 = arith.constant 0 : index
    %137 = vector.load %arg6[%c0_86, %c0_87] : memref<128x4xf32, #tpu.memory_space<vmem>>, vector<128x4xf32>
    %cst_88 = arith.constant dense<0.000000e+00> : vector<8x4xf32>
    %138 = tpu.matmul %136, %137, %cst_88 {dimension_numbers = #tpu.dot_dimension_numbers<[1], [0], [0], [1], [0, 0, 1, 1], [], []>} : vector<8x128xf32>, vector<128x4xf32>, vector<8x4xf32> -> vector<8x4xf32>
    %c0_89 = arith.constant 0 : index
    %c0_90 = arith.constant 0 : index
    %139 = memref.load %arg7[%c0_89, %c0_90] : memref<1x1xf32, #tpu.memory_space<smem>>
    %140 = vector.broadcast %139 : f32 to vector<8x4xf32>
    %141 = arith.addf %138, %140 : vector<8x4xf32>
    %142 = arith.negf %141 : vector<8x4xf32>
    %143 = math.exp %142 : vector<8x4xf32>
    %cst_91 = arith.constant 1.000000e+00 : f32
    %144 = vector.broadcast %cst_91 : f32 to vector<8x4xf32>
    %145 = arith.addf %144, %143 : vector<8x4xf32>
    %146 = arith.divf %144, %145 : vector<8x4xf32>
    %c0_92 = arith.constant 0 : index
    %c0_93 = arith.constant 0 : index
    %147 = vector.load %arg8[%c0_92, %c0_93] : memref<8x4xf32, #tpu.memory_space<vmem>>, vector<8x4xf32>
    tpu.vector_store %arg8[%c0_92, %c0_93], %146 {strides = array<i32>} : memref<8x4xf32, #tpu.memory_space<vmem>>, vector<8x4xf32>,
    return
  }
  func.func @transform_0(%arg0: i32) -> (i32, i32, i32) {
    %c0_i32 = arith.constant 0 : i32
    %c0_i32_0 = arith.constant 0 : i32
    %c0_i32_1 = arith.constant 0 : i32
    return %c0_i32, %arg0, %c0_i32_0 : i32, i32, i32
  }
  func.func @transform_1(%arg0: i32) -> (i32, i32) {
    %c0_i32 = arith.constant 0 : i32
    %c0_i32_0 = arith.constant 0 : i32
    %c0_i32_1 = arith.constant 0 : i32
    return %c0_i32, %c0_i32_0 : i32, i32
  }
  func.func @transform_2(%arg0: i32) -> (i32, i32) {
    %c0_i32 = arith.constant 0 : i32
    %c0_i32_0 = arith.constant 0 : i32
    %c0_i32_1 = arith.constant 0 : i32
    return %c0_i32, %c0_i32_0 : i32, i32
  }
  func.func @transform_3(%arg0: i32) -> (i32, i32) {
    %c0_i32 = arith.constant 0 : i32
    %c0_i32_0 = arith.constant 0 : i32
    %c0_i32_1 = arith.constant 0 : i32
    return %c0_i32, %c0_i32_0 : i32, i32
  }
  func.func @transform_4(%arg0: i32) -> (i32, i32) {
    %c0_i32 = arith.constant 0 : i32
    %c0_i32_0 = arith.constant 0 : i32
    %c0_i32_1 = arith.constant 0 : i32
    return %c0_i32, %c0_i32_0 : i32, i32
  }
  func.func @transform_5(%arg0: i32) -> (i32, i32) {
    %c0_i32 = arith.constant 0 : i32
    %c0_i32_0 = arith.constant 0 : i32
    %c0_i32_1 = arith.constant 0 : i32
    return %c0_i32, %c0_i32_0 : i32, i32
  }
  func.func @transform_6(%arg0: i32) -> (i32, i32) {
    %c0_i32 = arith.constant 0 : i32
    %c0_i32_0 = arith.constant 0 : i32
    %c0_i32_1 = arith.constant 0 : i32
    return %c0_i32, %c0_i32_0 : i32, i32
  }
  func.func @transform_7(%arg0: i32) -> (i32, i32) {
    %c0_i32 = arith.constant 0 : i32
    %c0_i32_0 = arith.constant 0 : i32
    return %arg0, %c0_i32 : i32, i32
  }
}

</mosaic_0001>

<llo_original>
// kernel: tile.17
$region0: #{tile.17}
  %s0 = inlined_call_operand.vmem [shape: f32[8,4,32], index: 0, kind: input, shape index: {}]
  %s1 = inlined_call_operand.vmem [shape: f32[8,128], index: 1, kind: output, shape index: {}]
  $region1: #{tile.17} parent=0
    #allocation0 [shape = 'u8[32768]{0}', space=vmem, size = 0x8000, scoped, tag = 'scoped mem for input reshape']
    %s3 = sshllo.u32 0, 4
    %s4 = smul.addr 4, 7
    %s5 = scalar_lea.vmem %s0, %s4
    %v6 = vld [vmem:[%s5] sm:%s3]
    %s7 = scalar_lea.vmem [#allocation0], 56
    %8 = vst [vmem:[%s7] sm:%s3] %v6
    %s9 = smul.addr 4, 6
    %s10 = scalar_lea.vmem %s0, %s9
    %v11 = vld [vmem:[%s10] sm:%s3]
    %s12 = scalar_lea.vmem [#allocation0], 48
    %13 = vst [vmem:[%s12] sm:%s3] %v11
    %s14 = smul.addr 4, 5
    %s15 = scalar_lea.vmem %s0, %s14
    %v16 = vld [vmem:[%s15] sm:%s3]
    %s17 = scalar_lea.vmem [#allocation0], 40
    %18 = vst [vmem:[%s17] sm:%s3] %v16
    %s19 = smul.addr 4, 4
    %s20 = scalar_lea.vmem %s0, %s19
    %v21 = vld [vmem:[%s20] sm:%s3]
    %s22 = scalar_lea.vmem [#allocation0], 32
    %23 = vst [vmem:[%s22] sm:%s3] %v21
    %s24 = smul.addr 4, 3
    %s25 = scalar_lea.vmem %s0, %s24
    %v26 = vld [vmem:[%s25] sm:%s3]
    %s27 = scalar_lea.vmem [#allocation0], 24
    %28 = vst [vmem:[%s27] sm:%s3] %v26
    %s29 = smul.addr 4, 2
    %s30 = scalar_lea.vmem %s0, %s29
    %v31 = vld [vmem:[%s30] sm:%s3]
    %s32 = scalar_lea.vmem [#allocation0], 16
    %33 = vst [vmem:[%s32] sm:%s3] %v31
    %s34 = scalar_lea.vmem %s0, 4
    %v35 = vld [vmem:[%s34] sm:%s3]
    %s36 = scalar_lea.vmem [#allocation0], 8
    %37 = vst [vmem:[%s36] sm:%s3] %v35
    %v38 = vld [vmem:[%s0] sm:%s3]
    %39 = vst [vmem:[#allocation0] sm:%s3] %v38
    %v40 = vld [vmem:[#allocation0] ss:$8 sm:$0xf]
    %v41 = vld [vmem:[#allocation0] ss:$8 sm:$0xf0]
    %vm42 = vcmask 1047556
    %v43 = vsel %vm42, %v41, %v40
    %vm44 = vcmask 261120
    %45 = vst.msk [vmem:[%s1] sm:$0xff] %vm44, %v43
    %s46 = scalar_lea.vmem [#allocation0], 3
    %v47 = vld [vmem:[%s46] ss:$8 sm:$0xf]
    %s48 = scalar_lea.vmem [#allocation0], 3
    %v49 = vld [vmem:[%s48] ss:$8 sm:$0xf0]
    %vm50 = vcmask 1047556
    %v51 = vsel %vm50, %v49, %v47
    %52 = vrot.lane.b32.xlu0 %v51, 96
    %v53 = vpop.permute.xlu0 %52
    %vm54 = vcmask 1048320
    %55 = vst.msk [vmem:[%s1] sm:$0xff] %vm54, %v53
    %s56 = scalar_lea.vmem [#allocation0], 2
    %v57 = vld [vmem:[%s56] ss:$8 sm:$0xf]
    %s58 = scalar_lea.vmem [#allocation0], 2
    %v59 = vld [vmem:[%s58] ss:$8 sm:$0xf0]
    %vm60 = vcmask 1047556
    %v61 = vsel %vm60, %v59, %v57
    %62 = vrot.lane.b32.xlu0 %v61, 64
    %v63 = vpop.permute.xlu0 %62
    %vm64 = vcmask 785920
    %65 = vst.msk [vmem:[%s1] sm:$0xff] %vm64, %v63
    %s66 = scalar_lea.vmem [#allocation0], 1
    %v67 = vld [vmem:[%s66] ss:$8 sm:$0xf]
    %s68 = scalar_lea.vmem [#allocation0], 1
    %v69 = vld [vmem:[%s68] ss:$8 sm:$0xf0]
    %vm70 = vcmask 1047556
    %v71 = vsel %vm70, %v69, %v67
    %72 = vrot.lane.b32.xlu0 %v71, 32
    %v73 = vpop.permute.xlu0 %72
    %vm74 = vcmask 523520
    %75 = vst.msk [vmem:[%s1] sm:$0xff] %vm74, %v73

// kernel: rnnnet_forward.1
$region0: #{rnnnet_forward.1}
  #allocation0 [shape = 'u32[]', space=smem, size = 0x4, offset = 0x4, fixed_abs, tag = 'smem constant byte address 0x4 - core index']
  #allocation1 [shape = 'u32[144,128]{1,0:T(1,128)}', space=vmem, size = 0x12000, scoped, tag = 'internal scratch']
  #allocation2 [shape = 'f32[8,8,128]{2,1,0:T(8,128)}', space=vmem, size = 0x8000, scoped, tag = 'scratch operand']
  #allocation3 [shape = 'f32[1,1]{1,0:T(1,128)S(6)}', space=smem, size = 0x200, scoped, tag = 'scoped memory for rnnnet_forward.1']
  %s0 = inlined_call_operand.vmem [shape: f32[8,8,64], index: 0, kind: input, shape index: {}]
  %s1 = inlined_call_operand.vmem [shape: f32[64,128], index: 1, kind: input, shape index: {}]
  %s2 = inlined_call_operand.vmem [shape: f32[128,128], index: 2, kind: input, shape index: {}]
  %s3 = inlined_call_operand.vmem [shape: f32[1,128], index: 3, kind: input, shape index: {}]
  %s4 = inlined_call_operand.vmem [shape: f32[8,128], index: 4, kind: input, shape index: {}]
  %s5 = inlined_call_operand.vmem [shape: f32[128,4], index: 5, kind: input, shape index: {}]
  %s6 = inlined_call_operand.<no memory space> [shape: f32[1,1], index: 6, kind: input, shape index: {}]
  %s7 = inlined_call_operand.vmem [shape: f32[8,4], index: 7, kind: output, shape index: {}]
  %s8 = sld [smem:[#allocation0]]
  $region38: #{rnnnet_forward.1} parent=0
    _
  %s10 = ssub.s32 1, %s8
  %s11 = scalar_select 0, %s10, %s8
  %12 = sst [smem:[#allocation3]] %s6
  // Predicated region
  $region2: #{rnnnet_forward.1} parent=0 // pred_check
    _
  $region3: #{rnnnet_forward.1} parent=0 // pred_check_branch
    %14 = sbr.rel (0) target = $region5
  $region4: #{rnnnet_forward.1} parent=0 // pred_region
    _
  $region5: #{rnnnet_forward.1} parent=0 // pred_fallthru
    _
  // Predicated region
  $region6: #{rnnnet_forward.1} parent=0 // pred_check
    _
  $region7: #{rnnnet_forward.1} parent=0 // pred_check_branch
    %16 = sbr.rel (0) target = $region9
  $region8: #{rnnnet_forward.1} parent=0 // pred_region
    _
  $region9: #{rnnnet_forward.1} parent=0 // pred_fallthru
    _
  // Predicated region
  $region10: #{rnnnet_forward.1} parent=0 // pred_check
    _
  $region11: #{rnnnet_forward.1} parent=0 // pred_check_branch
    %18 = sbr.rel (0) target = $region13
  $region12: #{rnnnet_forward.1} parent=0 // pred_region
    _
  $region13: #{rnnnet_forward.1} parent=0 // pred_fallthru
    _
  // Predicated region
  $region14: #{rnnnet_forward.1} parent=0 // pred_check
    _
  $region15: #{rnnnet_forward.1} parent=0 // pred_check_branch
    %20 = sbr.rel (0) target = $region17
  $region16: #{rnnnet_forward.1} parent=0 // pred_region
    _
  $region17: #{rnnnet_forward.1} parent=0 // pred_fallthru
    _
  // Predicated region
  $region18: #{rnnnet_forward.1} parent=0 // pred_check
    _
  $region19: #{rnnnet_forward.1} parent=0 // pred_check_branch
    %22 = sbr.rel (0) target = $region21
  $region20: #{rnnnet_forward.1} parent=0 // pred_region
    _
  $region21: #{rnnnet_forward.1} parent=0 // pred_fallthru
    _
  // Predicated region
  $region22: #{rnnnet_forward.1} parent=0 // pred_check
    _
  $region23: #{rnnnet_forward.1} parent=0 // pred_check_branch
    %24 = sbr.rel (0) target = $region25
  $region24: #{rnnnet_forward.1} parent=0 // pred_region
    _
  $region25: #{rnnnet_forward.1} parent=0 // pred_fallthru
    _
  // Predicated region
  $region26: #{rnnnet_forward.1} parent=0 // pred_check
    _
  $region27: #{rnnnet_forward.1} parent=0 // pred_check_branch
    %26 = sbr.rel (0) target = $region29
  $region28: #{rnnnet_forward.1} parent=0 // pred_region
    _
  $region29: #{rnnnet_forward.1} parent=0 // pred_fallthru
    _
  %v27 = vld [vmem:[%s1] sm:$0xff]
  %v28 = vld [vmem:[%s1 + $0x8] sm:$0xff]
  %v29 = vld [vmem:[%s1 + $0x10] sm:$0xff]
  %v30 = vld [vmem:[%s1 + $0x18] sm:$0xff]
  %v31 = vld [vmem:[%s1 + $0x20] sm:$0xff]
  %v32 = vld [vmem:[%s1 + $0x28] sm:$0xff]
  %v33 = vld [vmem:[%s1 + $0x30] sm:$0xff]
  %v34 = vld [vmem:[%s1 + $0x38] sm:$0xff]
  %v35 = vld [vmem:[%s3] sm:$0x1]
  %v36 = vld [vmem:[%s0] sm:$0xff]
  %v38 = vlaneseq
  %v39 = vshrl.u32 %v38, 7
  %v40 = vsub.s32 0, %v39
  %v41 = vrot.slane %v35, %v40
  %vm43 = vcmask 523264
  %v45 = vsel %vm43, %v36, 0
  %47 = vmatprep.subr.mxu0 0.0
  %48 = vmatpush1.msra.mxu0 %v27
  %49 = vmatprep.subr.mxu0 0.0
  %50 = vmatpush1.msra.mxu0 %v28
  %51 = vmatprep.subr.mxu0 0.0
  %52 = vmatpush1.msra.mxu0 %v29
  %53 = vmatprep.subr.mxu0 0.0
  %54 = vmatpush1.msra.mxu0 %v30
  %55 = vmatprep.subr.mxu0 0.0
  %56 = vmatpush1.msra.mxu0 %v31
  %57 = vmatprep.subr.mxu0 0.0
  %58 = vmatpush1.msra.mxu0 %v32
  %59 = vmatprep.subr.mxu0 0.0
  %60 = vmatpush1.msra.mxu0 %v33
  %61 = vmatprep.subr.mxu0 0.0
  %62 = vmatpush1.msra.mxu0 %v34
  %63 = vmatprep.subr.mxu0 0.0
  %64 = vmatpush1.msra.mxu0 0.0
  %65 = vmatprep.subr.mxu0 0.0
  %66 = vmatpush1.msra.mxu0 0.0
  %67 = vmatprep.subr.mxu0 0.0
  %68 = vmatpush1.msra.mxu0 0.0
  %69 = vmatprep.subr.mxu0 0.0
  %70 = vmatpush1.msra.mxu0 0.0
  %71 = vmatprep.subr.mxu0 0.0
  %72 = vmatpush1.msra.mxu0 0.0
  %73 = vmatprep.subr.mxu0 0.0
  %74 = vmatpush1.msra.mxu0 0.0
  %75 = vmatprep.subr.mxu0 0.0
  %76 = vmatpush1.msra.mxu0 0.0
  %77 = vmatprep.subr.mxu0 0.0
  %78 = vmatpush1.msra.mxu0 0.0
  %79 = vmatprep.subr.mxu0 0.0
  %80 = vmatpush1.msra.mxu0 0.0
  %81 = vmatprep.subr.mxu0 0.0
  %82 = vmatpush1.msra.mxu0 0.0
  %83 = vmatprep.subr.mxu0 0.0
  %84 = vmatpush1.msra.mxu0 0.0
  %85 = vmatprep.subr.mxu0 0.0
  %86 = vmatpush1.msra.mxu0 0.0
  %87 = vmatprep.subr.mxu0 0.0
  %88 = vmatpush1.msra.mxu0 0.0
  %89 = vmatprep.subr.mxu0 0.0
  %90 = vmatpush1.msra.mxu0 0.0
  %91 = vmatprep.subr.mxu0 0.0
  %92 = vmatpush1.msra.mxu0 0.0
  %93 = vmatprep.subr.mxu0 0.0
  %94 = vmatpush1.msra.mxu0 0.0
  %95 = vmatprep.subr.mxu0 0.0
  %96 = vmatpush1.msra.mxu0 0.0
  %97 = vmatprep.subr.mxu0 0.0
  %98 = vmatpush1.msra.mxu0 0.0
  %99 = vmatprep.subr.mxu0 0.0
  %100 = vmatpush1.msra.mxu0 0.0
  %101 = vmatprep.subr.mxu0 0.0
  %102 = vmatpush1.msra.mxu0 0.0
  %103 = vmatprep.subr.mxu0 0.0
  %104 = vmatpush1.msra.mxu0 0.0
  %105 = vmatprep.subr.mxu0 0.0
  %106 = vmatpush1.msra.mxu0 0.0
  %107 = vmatprep.subr.mxu0 0.0
  %108 = vmatpush1.msra.mxu0 0.0
  %109 = vmatprep.subr.mxu0 0.0
  %110 = vmatpush1.msra.mxu0 0.0
  %111 = vmatprep.mubr.f32.mxu0 0.0
  %112 = vmatmul.mubr.f32.gmra.mrb[0].mxu0 %v45
  %v113 = vpop.f32.mrb[0].mxu0
  %v114 = vadd.f32 %v41, %v113
  %v115 = vpop.f32.mrb[0].mxu0
  %116 = vdwg.mxu0
  %117 = vst [vmem:[#allocation2] sm:$0xff] %v114
  %s118 = scalar_lea.vmem %s0, 8
  %v119 = vld [vmem:[%s118] sm:$0xff]
  %v121 = vsel %vm43, %v119, 0
  %123 = vmatprep.subr.mxu0 0.0
  %124 = vmatpush1.msra.mxu0 %v27
  %125 = vmatprep.subr.mxu0 0.0
  %126 = vmatpush1.msra.mxu0 %v28
  %127 = vmatprep.subr.mxu0 0.0
  %128 = vmatpush1.msra.mxu0 %v29
  %129 = vmatprep.subr.mxu0 0.0
  %130 = vmatpush1.msra.mxu0 %v30
  %131 = vmatprep.subr.mxu0 0.0
  %132 = vmatpush1.msra.mxu0 %v31
  %133 = vmatprep.subr.mxu0 0.0
  %134 = vmatpush1.msra.mxu0 %v32
  %135 = vmatprep.subr.mxu0 0.0
  %136 = vmatpush1.msra.mxu0 %v33
  %137 = vmatprep.subr.mxu0 0.0
  %138 = vmatpush1.msra.mxu0 %v34
  %139 = vmatprep.subr.mxu0 0.0
  %140 = vmatpush1.msra.mxu0 0.0
  %141 = vmatprep.subr.mxu0 0.0
  %142 = vmatpush1.msra.mxu0 0.0
  %143 = vmatprep.subr.mxu0 0.0
  %144 = vmatpush1.msra.mxu0 0.0
  %145 = vmatprep.subr.mxu0 0.0
  %146 = vmatpush1.msra.mxu0 0.0
  %147 = vmatprep.subr.mxu0 0.0
  %148 = vmatpush1.msra.mxu0 0.0
  %149 = vmatprep.subr.mxu0 0.0
  %150 = vmatpush1.msra.mxu0 0.0
  %151 = vmatprep.subr.mxu0 0.0
  %152 = vmatpush1.msra.mxu0 0.0
  %153 = vmatprep.subr.mxu0 0.0
  %154 = vmatpush1.msra.mxu0 0.0
  %155 = vmatprep.subr.mxu0 0.0
  %156 = vmatpush1.msra.mxu0 0.0
  %157 = vmatprep.subr.mxu0 0.0
  %158 = vmatpush1.msra.mxu0 0.0
  %159 = vmatprep.subr.mxu0 0.0
  %160 = vmatpush1.msra.mxu0 0.0
  %161 = vmatprep.subr.mxu0 0.0
  %162 = vmatpush1.msra.mxu0 0.0
  %163 = vmatprep.subr.mxu0 0.0
  %164 = vmatpush1.msra.mxu0 0.0
  %165 = vmatprep.subr.mxu0 0.0
  %166 = vmatpush1.msra.mxu0 0.0
  %167 = vmatprep.subr.mxu0 0.0
  %168 = vmatpush1.msra.mxu0 0.0
  %169 = vmatprep.subr.mxu0 0.0
  %170 = vmatpush1.msra.mxu0 0.0
  %171 = vmatprep.subr.mxu0 0.0
  %172 = vmatpush1.msra.mxu0 0.0
  %173 = vmatprep.subr.mxu0 0.0
  %174 = vmatpush1.msra.mxu0 0.0
  %175 = vmatprep.subr.mxu0 0.0
  %176 = vmatpush1.msra.mxu0 0.0
  %177 = vmatprep.subr.mxu0 0.0
  %178 = vmatpush1.msra.mxu0 0.0
  %179 = vmatprep.subr.mxu0 0.0
  %180 = vmatpush1.msra.mxu0 0.0
  %181 = vmatprep.subr.mxu0 0.0
  %182 = vmatpush1.msra.mxu0 0.0
  %183 = vmatprep.subr.mxu0 0.0
  %184 = vmatpush1.msra.mxu0 0.0
  %185 = vmatprep.subr.mxu0 0.0
  %186 = vmatpush1.msra.mxu0 0.0
  %187 = vmatprep.mubr.f32.mxu0 0.0
  %188 = vmatmul.mubr.f32.gmra.mrb[0].mxu0 %v121
  %v189 = vpop.f32.mrb[0].mxu0
  %v190 = vadd.f32 %v41, %v189
  %v191 = vpop.f32.mrb[0].mxu0
  %192 = vdwg.mxu0
  %s193 = scalar_lea.vmem [#allocation2], 8
  %194 = vst [vmem:[%s193] sm:$0xff] %v190
  %s195 = scalar_lea.vmem %s0, 16
  %v196 = vld [vmem:[%s195] sm:$0xff]
  %v198 = vsel %vm43, %v196, 0
  %200 = vmatprep.subr.mxu0 0.0
  %201 = vmatpush1.msra.mxu0 %v27
  %202 = vmatprep.subr.mxu0 0.0
  %203 = vmatpush1.msra.mxu0 %v28
  %204 = vmatprep.subr.mxu0 0.0
  %205 = vmatpush1.msra.mxu0 %v29
  %206 = vmatprep.subr.mxu0 0.0
  %207 = vmatpush1.msra.mxu0 %v30
  %208 = vmatprep.subr.mxu0 0.0
  %209 = vmatpush1.msra.mxu0 %v31
  %210 = vmatprep.subr.mxu0 0.0
  %211 = vmatpush1.msra.mxu0 %v32
  %212 = vmatprep.subr.mxu0 0.0
  %213 = vmatpush1.msra.mxu0 %v33
  %214 = vmatprep.subr.mxu0 0.0
  %215 = vmatpush1.msra.mxu0 %v34
  %216 = vmatprep.subr.mxu0 0.0
  %217 = vmatpush1.msra.mxu0 0.0
  %218 = vmatprep.subr.mxu0 0.0
  %219 = vmatpush1.msra.mxu0 0.0
  %220 = vmatprep.subr.mxu0 0.0
  %221 = vmatpush1.msra.mxu0 0.0
  %222 = vmatprep.subr.mxu0 0.0
  %223 = vmatpush1.msra.mxu0 0.0
  %224 = vmatprep.subr.mxu0 0.0
  %225 = vmatpush1.msra.mxu0 0.0
  %226 = vmatprep.subr.mxu0 0.0
  %227 = vmatpush1.msra.mxu0 0.0
  %228 = vmatprep.subr.mxu0 0.0
  %229 = vmatpush1.msra.mxu0 0.0
  %230 = vmatprep.subr.mxu0 0.0
  %231 = vmatpush1.msra.mxu0 0.0
  %232 = vmatprep.subr.mxu0 0.0
  %233 = vmatpush1.msra.mxu0 0.0
  %234 = vmatprep.subr.mxu0 0.0
  %235 = vmatpush1.msra.mxu0 0.0
  %236 = vmatprep.subr.mxu0 0.0
  %237 = vmatpush1.msra.mxu0 0.0
  %238 = vmatprep.subr.mxu0 0.0
  %239 = vmatpush1.msra.mxu0 0.0
  %240 = vmatprep.subr.mxu0 0.0
  %241 = vmatpush1.msra.mxu0 0.0
  %242 = vmatprep.subr.mxu0 0.0
  %243 = vmatpush1.msra.mxu0 0.0
  %244 = vmatprep.subr.mxu0 0.0
  %245 = vmatpush1.msra.mxu0 0.0
  %246 = vmatprep.subr.mxu0 0.0
  %247 = vmatpush1.msra.mxu0 0.0
  %248 = vmatprep.subr.mxu0 0.0
  %249 = vmatpush1.msra.mxu0 0.0
  %250 = vmatprep.subr.mxu0 0.0
  %251 = vmatpush1.msra.mxu0 0.0
  %252 = vmatprep.subr.mxu0 0.0
  %253 = vmatpush1.msra.mxu0 0.0
  %254 = vmatprep.subr.mxu0 0.0
  %255 = vmatpush1.msra.mxu0 0.0
  %256 = vmatprep.subr.mxu0 0.0
  %257 = vmatpush1.msra.mxu0 0.0
  %258 = vmatprep.subr.mxu0 0.0
  %259 = vmatpush1.msra.mxu0 0.0
  %260 = vmatprep.subr.mxu0 0.0
  %261 = vmatpush1.msra.mxu0 0.0
  %262 = vmatprep.subr.mxu0 0.0
  %263 = vmatpush1.msra.mxu0 0.0
  %264 = vmatprep.mubr.f32.mxu0 0.0
  %265 = vmatmul.mubr.f32.gmra.mrb[0].mxu0 %v198
  %v266 = vpop.f32.mrb[0].mxu0
  %v267 = vadd.f32 %v41, %v266
  %v268 = vpop.f32.mrb[0].mxu0
  %269 = vdwg.mxu0
  %s270 = scalar_lea.vmem [#allocation2], 16
  %271 = vst [vmem:[%s270] sm:$0xff] %v267
  %s272 = scalar_lea.vmem %s0, 24
  %v273 = vld [vmem:[%s272] sm:$0xff]
  %v275 = vsel %vm43, %v273, 0
  %277 = vmatprep.subr.mxu0 0.0
  %278 = vmatpush1.msra.mxu0 %v27
  %279 = vmatprep.subr.mxu0 0.0
  %280 = vmatpush1.msra.mxu0 %v28
  %281 = vmatprep.subr.mxu0 0.0
  %282 = vmatpush1.msra.mxu0 %v29
  %283 = vmatprep.subr.mxu0 0.0
  %284 = vmatpush1.msra.mxu0 %v30
  %285 = vmatprep.subr.mxu0 0.0
  %286 = vmatpush1.msra.mxu0 %v31
  %287 = vmatprep.subr.mxu0 0.0
  %288 = vmatpush1.msra.mxu0 %v32
  %289 = vmatprep.subr.mxu0 0.0
  %290 = vmatpush1.msra.mxu0 %v33
  %291 = vmatprep.subr.mxu0 0.0
  %292 = vmatpush1.msra.mxu0 %v34
  %293 = vmatprep.subr.mxu0 0.0
  %294 = vmatpush1.msra.mxu0 0.0
  %295 = vmatprep.subr.mxu0 0.0
  %296 = vmatpush1.msra.mxu0 0.0
  %297 = vmatprep.subr.mxu0 0.0
  %298 = vmatpush1.msra.mxu0 0.0
  %299 = vmatprep.subr.mxu0 0.0
  %300 = vmatpush1.msra.mxu0 0.0
  %301 = vmatprep.subr.mxu0 0.0
  %302 = vmatpush1.msra.mxu0 0.0
  %303 = vmatprep.subr.mxu0 0.0
  %304 = vmatpush1.msra.mxu0 0.0
  %305 = vmatprep.subr.mxu0 0.0
  %306 = vmatpush1.msra.mxu0 0.0
  %307 = vmatprep.subr.mxu0 0.0
  %308 = vmatpush1.msra.mxu0 0.0
  %309 = vmatprep.subr.mxu0 0.0
  %310 = vmatpush1.msra.mxu0 0.0
  %311 = vmatprep.subr.mxu0 0.0
  %312 = vmatpush1.msra.mxu0 0.0
  %313 = vmatprep.subr.mxu0 0.0
  %314 = vmatpush1.msra.mxu0 0.0
  %315 = vmatprep.subr.mxu0 0.0
  %316 = vmatpush1.msra.mxu0 0.0
  %317 = vmatprep.subr.mxu0 0.0
  %318 = vmatpush1.msra.mxu0 0.0
  %319 = vmatprep.subr.mxu0 0.0
  %320 = vmatpush1.msra.mxu0 0.0
  %321 = vmatprep.subr.mxu0 0.0
  %322 = vmatpush1.msra.mxu0 0.0
  %323 = vmatprep.subr.mxu0 0.0
  %324 = vmatpush1.msra.mxu0 0.0
  %325 = vmatprep.subr.mxu0 0.0
  %326 = vmatpush1.msra.mxu0 0.0
  %327 = vmatprep.subr.mxu0 0.0
  %328 = vmatpush1.msra.mxu0 0.0
  %329 = vmatprep.subr.mxu0 0.0
  %330 = vmatpush1.msra.mxu0 0.0
  %331 = vmatprep.subr.mxu0 0.0
  %332 = vmatpush1.msra.mxu0 0.0
  %333 = vmatprep.subr.mxu0 0.0
  %334 = vmatpush1.msra.mxu0 0.0
  %335 = vmatprep.subr.mxu0 0.0
  %336 = vmatpush1.msra.mxu0 0.0
  %337 = vmatprep.subr.mxu0 0.0
  %338 = vmatpush1.msra.mxu0 0.0
  %339 = vmatprep.subr.mxu0 0.0
  %340 = vmatpush1.msra.mxu0 0.0
  %341 = vmatprep.mubr.f32.mxu0 0.0
  %342 = vmatmul.mubr.f32.gmra.mrb[0].mxu0 %v275
  %v343 = vpop.f32.mrb[0].mxu0
  %v344 = vadd.f32 %v41, %v343
  %v345 = vpop.f32.mrb[0].mxu0
  %346 = vdwg.mxu0
  %s347 = scalar_lea.vmem [#allocation2], 24
  %348 = vst [vmem:[%s347] sm:$0xff] %v344
  %s349 = scalar_lea.vmem %s0, 32
  %v350 = vld [vmem:[%s349] sm:$0xff]
  %v352 = vsel %vm43, %v350, 0
  %354 = vmatprep.subr.mxu0 0.0
  %355 = vmatpush1.msra.mxu0 %v27
  %356 = vmatprep.subr.mxu0 0.0
  %357 = vmatpush1.msra.mxu0 %v28
  %358 = vmatprep.subr.mxu0 0.0
  %359 = vmatpush1.msra.mxu0 %v29
  %360 = vmatprep.subr.mxu0 0.0
  %361 = vmatpush1.msra.mxu0 %v30
  %362 = vmatprep.subr.mxu0 0.0
  %363 = vmatpush1.msra.mxu0 %v31
  %364 = vmatprep.subr.mxu0 0.0
  %365 = vmatpush1.msra.mxu0 %v32
  %366 = vmatprep.subr.mxu0 0.0
  %367 = vmatpush1.msra.mxu0 %v33
  %368 = vmatprep.subr.mxu0 0.0
  %369 = vmatpush1.msra.mxu0 %v34
  %370 = vmatprep.subr.mxu0 0.0
  %371 = vmatpush1.msra.mxu0 0.0
  %372 = vmatprep.subr.mxu0 0.0
  %373 = vmatpush1.msra.mxu0 0.0
  %374 = vmatprep.subr.mxu0 0.0
  %375 = vmatpush1.msra.mxu0 0.0
  %376 = vmatprep.subr.mxu0 0.0
  %377 = vmatpush1.msra.mxu0 0.0
  %378 = vmatprep.subr.mxu0 0.0
  %379 = vmatpush1.msra.mxu0 0.0
  %380 = vmatprep.subr.mxu0 0.0
  %381 = vmatpush1.msra.mxu0 0.0
  %382 = vmatprep.subr.mxu0 0.0
  %383 = vmatpush1.msra.mxu0 0.0
  %384 = vmatprep.subr.mxu0 0.0
  %385 = vmatpush1.msra.mxu0 0.0
  %386 = vmatprep.subr.mxu0 0.0
  %387 = vmatpush1.msra.mxu0 0.0
  %388 = vmatprep.subr.mxu0 0.0
  %389 = vmatpush1.msra.mxu0 0.0
  %390 = vmatprep.subr.mxu0 0.0
  %391 = vmatpush1.msra.mxu0 0.0
  %392 = vmatprep.subr.mxu0 0.0
  %393 = vmatpush1.msra.mxu0 0.0
  %394 = vmatprep.subr.mxu0 0.0
  %395 = vmatpush1.msra.mxu0 0.0
  %396 = vmatprep.subr.mxu0 0.0
  %397 = vmatpush1.msra.mxu0 0.0
  %398 = vmatprep.subr.mxu0 0.0
  %399 = vmatpush1.msra.mxu0 0.0
  %400 = vmatprep.subr.mxu0 0.0
  %401 = vmatpush1.msra.mxu0 0.0
  %402 = vmatprep.subr.mxu0 0.0
  %403 = vmatpush1.msra.mxu0 0.0
  %404 = vmatprep.subr.mxu0 0.0
  %405 = vmatpush1.msra.mxu0 0.0
  %406 = vmatprep.subr.mxu0 0.0
  %407 = vmatpush1.msra.mxu0 0.0
  %408 = vmatprep.subr.mxu0 0.0
  %409 = vmatpush1.msra.mxu0 0.0
  %410 = vmatprep.subr.mxu0 0.0
  %411 = vmatpush1.msra.mxu0 0.0
  %412 = vmatprep.subr.mxu0 0.0
  %413 = vmatpush1.msra.mxu0 0.0
  %414 = vmatprep.subr.mxu0 0.0
  %415 = vmatpush1.msra.mxu0 0.0
  %416 = vmatprep.subr.mxu0 0.0
  %417 = vmatpush1.msra.mxu0 0.0
  %418 = vmatprep.mubr.f32.mxu0 0.0
  %419 = vmatmul.mubr.f32.gmra.mrb[0].mxu0 %v352
  %v420 = vpop.f32.mrb[0].mxu0
  %v421 = vadd.f32 %v41, %v420
  %v422 = vpop.f32.mrb[0].mxu0
  %423 = vdwg.mxu0
  %s424 = scalar_lea.vmem [#allocation2], 32
  %425 = vst [vmem:[%s424] sm:$0xff] %v421
  %s426 = scalar_lea.vmem %s0, 40
  %v427 = vld [vmem:[%s426] sm:$0xff]
  %v429 = vsel %vm43, %v427, 0
  %431 = vmatprep.subr.mxu0 0.0
  %432 = vmatpush1.msra.mxu0 %v27
  %433 = vmatprep.subr.mxu0 0.0
  %434 = vmatpush1.msra.mxu0 %v28
  %435 = vmatprep.subr.mxu0 0.0
  %436 = vmatpush1.msra.mxu0 %v29
  %437 = vmatprep.subr.mxu0 0.0
  %438 = vmatpush1.msra.mxu0 %v30
  %439 = vmatprep.subr.mxu0 0.0
  %440 = vmatpush1.msra.mxu0 %v31
  %441 = vmatprep.subr.mxu0 0.0
  %442 = vmatpush1.msra.mxu0 %v32
  %443 = vmatprep.subr.mxu0 0.0
  %444 = vmatpush1.msra.mxu0 %v33
  %445 = vmatprep.subr.mxu0 0.0
  %446 = vmatpush1.msra.mxu0 %v34
  %447 = vmatprep.subr.mxu0 0.0
  %448 = vmatpush1.msra.mxu0 0.0
  %449 = vmatprep.subr.mxu0 0.0
  %450 = vmatpush1.msra.mxu0 0.0
  %451 = vmatprep.subr.mxu0 0.0
  %452 = vmatpush1.msra.mxu0 0.0
  %453 = vmatprep.subr.mxu0 0.0
  %454 = vmatpush1.msra.mxu0 0.0
  %455 = vmatprep.subr.mxu0 0.0
  %456 = vmatpush1.msra.mxu0 0.0
  %457 = vmatprep.subr.mxu0 0.0
  %458 = vmatpush1.msra.mxu0 0.0
  %459 = vmatprep.subr.mxu0 0.0
  %460 = vmatpush1.msra.mxu0 0.0
  %461 = vmatprep.subr.mxu0 0.0
  %462 = vmatpush1.msra.mxu0 0.0
  %463 = vmatprep.subr.mxu0 0.0
  %464 = vmatpush1.msra.mxu0 0.0
  %465 = vmatprep.subr.mxu0 0.0
  %466 = vmatpush1.msra.mxu0 0.0
  %467 = vmatprep.subr.mxu0 0.0
  %468 = vmatpush1.msra.mxu0 0.0
  %469 = vmatprep.subr.mxu0 0.0
  %470 = vmatpush1.msra.mxu0 0.0
  %471 = vmatprep.subr.mxu0 0.0
  %472 = vmatpush1.msra.mxu0 0.0
  %473 = vmatprep.subr.mxu0 0.0
  %474 = vmatpush1.msra.mxu0 0.0
  %475 = vmatprep.subr.mxu0 0.0
  %476 = vmatpush1.msra.mxu0 0.0
  %477 = vmatprep.subr.mxu0 0.0
  %478 = vmatpush1.msra.mxu0 0.0
  %479 = vmatprep.subr.mxu0 0.0
  %480 = vmatpush1.msra.mxu0 0.0
  %481 = vmatprep.subr.mxu0 0.0
  %482 = vmatpush1.msra.mxu0 0.0
  %483 = vmatprep.subr.mxu0 0.0
  %484 = vmatpush1.msra.mxu0 0.0
  %485 = vmatprep.subr.mxu0 0.0
  %486 = vmatpush1.msra.mxu0 0.0
  %487 = vmatprep.subr.mxu0 0.0
  %488 = vmatpush1.msra.mxu0 0.0
  %489 = vmatprep.subr.mxu0 0.0
  %490 = vmatpush1.msra.mxu0 0.0
  %491 = vmatprep.subr.mxu0 0.0
  %492 = vmatpush1.msra.mxu0 0.0
  %493 = vmatprep.subr.mxu0 0.0
  %494 = vmatpush1.msra.mxu0 0.0
  %495 = vmatprep.mubr.f32.mxu0 0.0
  %496 = vmatmul.mubr.f32.gmra.mrb[0].mxu0 %v429
  %v497 = vpop.f32.mrb[0].mxu0
  %v498 = vadd.f32 %v41, %v497
  %v499 = vpop.f32.mrb[0].mxu0
  %500 = vdwg.mxu0
  %s501 = scalar_lea.vmem [#allocation2], 40
  %502 = vst [vmem:[%s501] sm:$0xff] %v498
  %s503 = scalar_lea.vmem %s0, 48
  %v504 = vld [vmem:[%s503] sm:$0xff]
  %v506 = vsel %vm43, %v504, 0
  %508 = vmatprep.subr.mxu0 0.0
  %509 = vmatpush1.msra.mxu0 %v27
  %510 = vmatprep.subr.mxu0 0.0
  %511 = vmatpush1.msra.mxu0 %v28
  %512 = vmatprep.subr.mxu0 0.0
  %513 = vmatpush1.msra.mxu0 %v29
  %514 = vmatprep.subr.mxu0 0.0
  %515 = vmatpush1.msra.mxu0 %v30
  %516 = vmatprep.subr.mxu0 0.0
  %517 = vmatpush1.msra.mxu0 %v31
  %518 = vmatprep.subr.mxu0 0.0
  %519 = vmatpush1.msra.mxu0 %v32
  %520 = vmatprep.subr.mxu0 0.0
  %521 = vmatpush1.msra.mxu0 %v33
  %522 = vmatprep.subr.mxu0 0.0
  %523 = vmatpush1.msra.mxu0 %v34
  %524 = vmatprep.subr.mxu0 0.0
  %525 = vmatpush1.msra.mxu0 0.0
  %526 = vmatprep.subr.mxu0 0.0
  %527 = vmatpush1.msra.mxu0 0.0
  %528 = vmatprep.subr.mxu0 0.0
  %529 = vmatpush1.msra.mxu0 0.0
  %530 = vmatprep.subr.mxu0 0.0
  %531 = vmatpush1.msra.mxu0 0.0
  %532 = vmatprep.subr.mxu0 0.0
  %533 = vmatpush1.msra.mxu0 0.0
  %534 = vmatprep.subr.mxu0 0.0
  %535 = vmatpush1.msra.mxu0 0.0
  %536 = vmatprep.subr.mxu0 0.0
  %537 = vmatpush1.msra.mxu0 0.0
  %538 = vmatprep.subr.mxu0 0.0
  %539 = vmatpush1.msra.mxu0 0.0
  %540 = vmatprep.subr.mxu0 0.0
  %541 = vmatpush1.msra.mxu0 0.0
  %542 = vmatprep.subr.mxu0 0.0
  %543 = vmatpush1.msra.mxu0 0.0
  %544 = vmatprep.subr.mxu0 0.0
  %545 = vmatpush1.msra.mxu0 0.0
  %546 = vmatprep.subr.mxu0 0.0
  %547 = vmatpush1.msra.mxu0 0.0
  %548 = vmatprep.subr.mxu0 0.0
  %549 = vmatpush1.msra.mxu0 0.0
  %550 = vmatprep.subr.mxu0 0.0
  %551 = vmatpush1.msra.mxu0 0.0
  %552 = vmatprep.subr.mxu0 0.0
  %553 = vmatpush1.msra.mxu0 0.0
  %554 = vmatprep.subr.mxu0 0.0
  %555 = vmatpush1.msra.mxu0 0.0
  %556 = vmatprep.subr.mxu0 0.0
  %557 = vmatpush1.msra.mxu0 0.0
  %558 = vmatprep.subr.mxu0 0.0
  %559 = vmatpush1.msra.mxu0 0.0
  %560 = vmatprep.subr.mxu0 0.0
  %561 = vmatpush1.msra.mxu0 0.0
  %562 = vmatprep.subr.mxu0 0.0
  %563 = vmatpush1.msra.mxu0 0.0
  %564 = vmatprep.subr.mxu0 0.0
  %565 = vmatpush1.msra.mxu0 0.0
  %566 = vmatprep.subr.mxu0 0.0
  %567 = vmatpush1.msra.mxu0 0.0
  %568 = vmatprep.subr.mxu0 0.0
  %569 = vmatpush1.msra.mxu0 0.0
  %570 = vmatprep.subr.mxu0 0.0
  %571 = vmatpush1.msra.mxu0 0.0
  %572 = vmatprep.mubr.f32.mxu0 0.0
  %573 = vmatmul.mubr.f32.gmra.mrb[0].mxu0 %v506
  %v574 = vpop.f32.mrb[0].mxu0
  %v575 = vadd.f32 %v41, %v574
  %v576 = vpop.f32.mrb[0].mxu0
  %577 = vdwg.mxu0
  %s578 = scalar_lea.vmem [#allocation2], 48
  %579 = vst [vmem:[%s578] sm:$0xff] %v575
  %s580 = scalar_lea.vmem %s0, 56
  %v581 = vld [vmem:[%s580] sm:$0xff]
  %v583 = vsel %vm43, %v581, 0
  %585 = vmatprep.subr.mxu0 0.0
  %586 = vmatpush1.msra.mxu0 %v27
  %587 = vmatprep.subr.mxu0 0.0
  %588 = vmatpush1.msra.mxu0 %v28
  %589 = vmatprep.subr.mxu0 0.0
  %590 = vmatpush1.msra.mxu0 %v29
  %591 = vmatprep.subr.mxu0 0.0
  %592 = vmatpush1.msra.mxu0 %v30
  %593 = vmatprep.subr.mxu0 0.0
  %594 = vmatpush1.msra.mxu0 %v31
  %595 = vmatprep.subr.mxu0 0.0
  %596 = vmatpush1.msra.mxu0 %v32
  %597 = vmatprep.subr.mxu0 0.0
  %598 = vmatpush1.msra.mxu0 %v33
  %599 = vmatprep.subr.mxu0 0.0
  %600 = vmatpush1.msra.mxu0 %v34
  %601 = vmatprep.subr.mxu0 0.0
  %602 = vmatpush1.msra.mxu0 0.0
  %603 = vmatprep.subr.mxu0 0.0
  %604 = vmatpush1.msra.mxu0 0.0
  %605 = vmatprep.subr.mxu0 0.0
  %606 = vmatpush1.msra.mxu0 0.0
  %607 = vmatprep.subr.mxu0 0.0
  %608 = vmatpush1.msra.mxu0 0.0
  %609 = vmatprep.subr.mxu0 0.0
  %610 = vmatpush1.msra.mxu0 0.0
  %611 = vmatprep.subr.mxu0 0.0
  %612 = vmatpush1.msra.mxu0 0.0
  %613 = vmatprep.subr.mxu0 0.0
  %614 = vmatpush1.msra.mxu0 0.0
  %615 = vmatprep.subr.mxu0 0.0
  %616 = vmatpush1.msra.mxu0 0.0
  %617 = vmatprep.subr.mxu0 0.0
  %618 = vmatpush1.msra.mxu0 0.0
  %619 = vmatprep.subr.mxu0 0.0
  %620 = vmatpush1.msra.mxu0 0.0
  %621 = vmatprep.subr.mxu0 0.0
  %622 = vmatpush1.msra.mxu0 0.0
  %623 = vmatprep.subr.mxu0 0.0
  %624 = vmatpush1.msra.mxu0 0.0
  %625 = vmatprep.subr.mxu0 0.0
  %626 = vmatpush1.msra.mxu0 0.0
  %627 = vmatprep.subr.mxu0 0.0
  %628 = vmatpush1.msra.mxu0 0.0
  %629 = vmatprep.subr.mxu0 0.0
  %630 = vmatpush1.msra.mxu0 0.0
  %631 = vmatprep.subr.mxu0 0.0
  %632 = vmatpush1.msra.mxu0 0.0
  %633 = vmatprep.subr.mxu0 0.0
  %634 = vmatpush1.msra.mxu0 0.0
  %635 = vmatprep.subr.mxu0 0.0
  %636 = vmatpush1.msra.mxu0 0.0
  %637 = vmatprep.subr.mxu0 0.0
  %638 = vmatpush1.msra.mxu0 0.0
  %639 = vmatprep.subr.mxu0 0.0
  %640 = vmatpush1.msra.mxu0 0.0
  %641 = vmatprep.subr.mxu0 0.0
  %642 = vmatpush1.msra.mxu0 0.0
  %643 = vmatprep.subr.mxu0 0.0
  %644 = vmatpush1.msra.mxu0 0.0
  %645 = vmatprep.subr.mxu0 0.0
  %646 = vmatpush1.msra.mxu0 0.0
  %647 = vmatprep.subr.mxu0 0.0
  %648 = vmatpush1.msra.mxu0 0.0
  %649 = vmatprep.mubr.f32.mxu0 0.0
  %650 = vmatmul.mubr.f32.gmra.mrb[0].mxu0 %v583
  %v651 = vpop.f32.mrb[0].mxu0
  %v652 = vadd.f32 %v41, %v651
  %v653 = vpop.f32.mrb[0].mxu0
  %654 = vdwg.mxu0
  %s655 = scalar_lea.vmem [#allocation2], 56
  %656 = vst [vmem:[%s655] sm:$0xff] %v652
  %v657 = vld [vmem:[%s2] sm:$0xff]
  %v658 = vld [vmem:[%s2 + $0x8] sm:$0xff]
  %v659 = vld [vmem:[%s2 + $0x10] sm:$0xff]
  %v660 = vld [vmem:[%s2 + $0x18] sm:$0xff]
  %v661 = vld [vmem:[%s2 + $0x20] sm:$0xff]
  %v662 = vld [vmem:[%s2 + $0x28] sm:$0xff]
  %v663 = vld [vmem:[%s2 + $0x30] sm:$0xff]
  %v664 = vld [vmem:[%s2 + $0x38] sm:$0xff]
  %v665 = vld [vmem:[%s2 + $0x40] sm:$0xff]
  %v666 = vld [vmem:[%s2 + $0x48] sm:$0xff]
  %v667 = vld [vmem:[%s2 + $0x50] sm:$0xff]
  %v668 = vld [vmem:[%s2 + $0x58] sm:$0xff]
  %v669 = vld [vmem:[%s2 + $0x60] sm:$0xff]
  %v670 = vld [vmem:[%s2 + $0x68] sm:$0xff]
  %v671 = vld [vmem:[%s2 + $0x70] sm:$0xff]
  %v672 = vld [vmem:[%s2 + $0x78] sm:$0xff]
  %v673 = vld [vmem:[%s4] sm:$0xff]
  %v674 = vld [vmem:[#allocation2] sm:$0xff]
  %v675 = vtanh.pop %v674
  %v676 = vlaneseq
  %v677 = vshrl.u32 %v676, 7
  %v678 = vsub.s32 0, %v677
  %v679 = vrot.slane %v673, %v678
  %v680 = vmul.f32 %v675, %v679
  %v681 = vld [vmem:[%s193] sm:$0xff]
  %682 = vmatprep.subr.mxu0 0.0
  %683 = vmatpush1.msra.mxu0 %v657
  %684 = vmatprep.subr.mxu0 0.0
  %685 = vmatpush1.msra.mxu0 %v658
  %686 = vmatprep.subr.mxu0 0.0
  %687 = vmatpush1.msra.mxu0 %v659
  %688 = vmatprep.subr.mxu0 0.0
  %689 = vmatpush1.msra.mxu0 %v660
  %690 = vmatprep.subr.mxu0 0.0
  %691 = vmatpush1.msra.mxu0 %v661
  %692 = vmatprep.subr.mxu0 0.0
  %693 = vmatpush1.msra.mxu0 %v662
  %694 = vmatprep.subr.mxu0 0.0
  %695 = vmatpush1.msra.mxu0 %v663
  %696 = vmatprep.subr.mxu0 0.0
  %697 = vmatpush1.msra.mxu0 %v664
  %698 = vmatprep.subr.mxu0 0.0
  %699 = vmatpush1.msra.mxu0 %v665
  %700 = vmatprep.subr.mxu0 0.0
  %701 = vmatpush1.msra.mxu0 %v666
  %702 = vmatprep.subr.mxu0 0.0
  %703 = vmatpush1.msra.mxu0 %v667
  %704 = vmatprep.subr.mxu0 0.0
  %705 = vmatpush1.msra.mxu0 %v668
  %706 = vmatprep.subr.mxu0 0.0
  %707 = vmatpush1.msra.mxu0 %v669
  %708 = vmatprep.subr.mxu0 0.0
  %709 = vmatpush1.msra.mxu0 %v670
  %710 = vmatprep.subr.mxu0 0.0
  %711 = vmatpush1.msra.mxu0 %v671
  %712 = vmatprep.subr.mxu0 0.0
  %713 = vmatpush1.msra.mxu0 %v672
  %714 = vmatprep.subr.mxu0 0.0
  %715 = vmatpush1.msra.mxu0 0.0
  %716 = vmatprep.subr.mxu0 0.0
  %717 = vmatpush1.msra.mxu0 0.0
  %718 = vmatprep.subr.mxu0 0.0
  %719 = vmatpush1.msra.mxu0 0.0
  %720 = vmatprep.subr.mxu0 0.0
  %721 = vmatpush1.msra.mxu0 0.0
  %722 = vmatprep.subr.mxu0 0.0
  %723 = vmatpush1.msra.mxu0 0.0
  %724 = vmatprep.subr.mxu0 0.0
  %725 = vmatpush1.msra.mxu0 0.0
  %726 = vmatprep.subr.mxu0 0.0
  %727 = vmatpush1.msra.mxu0 0.0
  %728 = vmatprep.subr.mxu0 0.0
  %729 = vmatpush1.msra.mxu0 0.0
  %730 = vmatprep.subr.mxu0 0.0
  %731 = vmatpush1.msra.mxu0 0.0
  %732 = vmatprep.subr.mxu0 0.0
  %733 = vmatpush1.msra.mxu0 0.0
  %734 = vmatprep.subr.mxu0 0.0
  %735 = vmatpush1.msra.mxu0 0.0
  %736 = vmatprep.subr.mxu0 0.0
  %737 = vmatpush1.msra.mxu0 0.0
  %738 = vmatprep.subr.mxu0 0.0
  %739 = vmatpush1.msra.mxu0 0.0
  %740 = vmatprep.subr.mxu0 0.0
  %741 = vmatpush1.msra.mxu0 0.0
  %742 = vmatprep.subr.mxu0 0.0
  %743 = vmatpush1.msra.mxu0 0.0
  %744 = vmatprep.subr.mxu0 0.0
  %745 = vmatpush1.msra.mxu0 0.0
  %746 = vmatprep.mubr.f32.mxu0 0.0
  %747 = vmatmul.mubr.f32.gmra.mrb[0].mxu0 %v675
  %v748 = vpop.f32.mrb[0].mxu0
  %v749 = vadd.f32 0.0, %v748
  %v750 = vpop.f32.mrb[0].mxu0
  %751 = vdwg.mxu0
  %v752 = vadd.f32 %v681, %v749
  %v753 = vtanh.pop %v752
  %v754 = vlaneseq
  %v755 = vshrl.u32 %v754, 7
  %v756 = vsub.s32 1, %v755
  %v757 = vrot.slane %v673, %v756
  %v758 = vmul.f32 %v753, %v757
  %v759 = vadd.f32 %v680, %v758
  %v760 = vld [vmem:[%s270] sm:$0xff]
  %761 = vmatprep.subr.mxu0 0.0
  %762 = vmatpush1.msra.mxu0 %v657
  %763 = vmatprep.subr.mxu0 0.0
  %764 = vmatpush1.msra.mxu0 %v658
  %765 = vmatprep.subr.mxu0 0.0
  %766 = vmatpush1.msra.mxu0 %v659
  %767 = vmatprep.subr.mxu0 0.0
  %768 = vmatpush1.msra.mxu0 %v660
  %769 = vmatprep.subr.mxu0 0.0
  %770 = vmatpush1.msra.mxu0 %v661
  %771 = vmatprep.subr.mxu0 0.0
  %772 = vmatpush1.msra.mxu0 %v662
  %773 = vmatprep.subr.mxu0 0.0
  %774 = vmatpush1.msra.mxu0 %v663
  %775 = vmatprep.subr.mxu0 0.0
  %776 = vmatpush1.msra.mxu0 %v664
  %777 = vmatprep.subr.mxu0 0.0
  %778 = vmatpush1.msra.mxu0 %v665
  %779 = vmatprep.subr.mxu0 0.0
  %780 = vmatpush1.msra.mxu0 %v666
  %781 = vmatprep.subr.mxu0 0.0
  %782 = vmatpush1.msra.mxu0 %v667
  %783 = vmatprep.subr.mxu0 0.0
  %784 = vmatpush1.msra.mxu0 %v668
  %785 = vmatprep.subr.mxu0 0.0
  %786 = vmatpush1.msra.mxu0 %v669
  %787 = vmatprep.subr.mxu0 0.0
  %788 = vmatpush1.msra.mxu0 %v670
  %789 = vmatprep.subr.mxu0 0.0
  %790 = vmatpush1.msra.mxu0 %v671
  %791 = vmatprep.subr.mxu0 0.0
  %792 = vmatpush1.msra.mxu0 %v672
  %793 = vmatprep.subr.mxu0 0.0
  %794 = vmatpush1.msra.mxu0 0.0
  %795 = vmatprep.subr.mxu0 0.0
  %796 = vmatpush1.msra.mxu0 0.0
  %797 = vmatprep.subr.mxu0 0.0
  %798 = vmatpush1.msra.mxu0 0.0
  %799 = vmatprep.subr.mxu0 0.0
  %800 = vmatpush1.msra.mxu0 0.0
  %801 = vmatprep.subr.mxu0 0.0
  %802 = vmatpush1.msra.mxu0 0.0
  %803 = vmatprep.subr.mxu0 0.0
  %804 = vmatpush1.msra.mxu0 0.0
  %805 = vmatprep.subr.mxu0 0.0
  %806 = vmatpush1.msra.mxu0 0.0
  %807 = vmatprep.subr.mxu0 0.0
  %808 = vmatpush1.msra.mxu0 0.0
  %809 = vmatprep.subr.mxu0 0.0
  %810 = vmatpush1.msra.mxu0 0.0
  %811 = vmatprep.subr.mxu0 0.0
  %812 = vmatpush1.msra.mxu0 0.0
  %813 = vmatprep.subr.mxu0 0.0
  %814 = vmatpush1.msra.mxu0 0.0
  %815 = vmatprep.subr.mxu0 0.0
  %816 = vmatpush1.msra.mxu0 0.0
  %817 = vmatprep.subr.mxu0 0.0
  %818 = vmatpush1.msra.mxu0 0.0
  %819 = vmatprep.subr.mxu0 0.0
  %820 = vmatpush1.msra.mxu0 0.0
  %821 = vmatprep.subr.mxu0 0.0
  %822 = vmatpush1.msra.mxu0 0.0
  %823 = vmatprep.subr.mxu0 0.0
  %824 = vmatpush1.msra.mxu0 0.0
  %825 = vmatprep.mubr.f32.mxu0 0.0
  %826 = vmatmul.mubr.f32.gmra.mrb[0].mxu0 %v753
  %v827 = vpop.f32.mrb[0].mxu0
  %v828 = vadd.f32 0.0, %v827
  %v829 = vpop.f32.mrb[0].mxu0
  %830 = vdwg.mxu0
  %v831 = vadd.f32 %v760, %v828
  %v832 = vtanh.pop %v831
  %v833 = vlaneseq
  %v834 = vshrl.u32 %v833, 7
  %v835 = vsub.s32 2, %v834
  %v836 = vrot.slane %v673, %v835
  %v837 = vmul.f32 %v832, %v836
  %v838 = vadd.f32 %v759, %v837
  %v839 = vld [vmem:[%s347] sm:$0xff]
  %840 = vmatprep.subr.mxu0 0.0
  %841 = vmatpush1.msra.mxu0 %v657
  %842 = vmatprep.subr.mxu0 0.0
  %843 = vmatpush1.msra.mxu0 %v658
  %844 = vmatprep.subr.mxu0 0.0
  %845 = vmatpush1.msra.mxu0 %v659
  %846 = vmatprep.subr.mxu0 0.0
  %847 = vmatpush1.msra.mxu0 %v660
  %848 = vmatprep.subr.mxu0 0.0
  %849 = vmatpush1.msra.mxu0 %v661
  %850 = vmatprep.subr.mxu0 0.0
  %851 = vmatpush1.msra.mxu0 %v662
  %852 = vmatprep.subr.mxu0 0.0
  %853 = vmatpush1.msra.mxu0 %v663
  %854 = vmatprep.subr.mxu0 0.0
  %855 = vmatpush1.msra.mxu0 %v664
  %856 = vmatprep.subr.mxu0 0.0
  %857 = vmatpush1.msra.mxu0 %v665
  %858 = vmatprep.subr.mxu0 0.0
  %859 = vmatpush1.msra.mxu0 %v666
  %860 = vmatprep.subr.mxu0 0.0
  %861 = vmatpush1.msra.mxu0 %v667
  %862 = vmatprep.subr.mxu0 0.0
  %863 = vmatpush1.msra.mxu0 %v668
  %864 = vmatprep.subr.mxu0 0.0
  %865 = vmatpush1.msra.mxu0 %v669
  %866 = vmatprep.subr.mxu0 0.0
  %867 = vmatpush1.msra.mxu0 %v670
  %868 = vmatprep.subr.mxu0 0.0
  %869 = vmatpush1.msra.mxu0 %v671
  %870 = vmatprep.subr.mxu0 0.0
  %871 = vmatpush1.msra.mxu0 %v672
  %872 = vmatprep.subr.mxu0 0.0
  %873 = vmatpush1.msra.mxu0 0.0
  %874 = vmatprep.subr.mxu0 0.0
  %875 = vmatpush1.msra.mxu0 0.0
  %876 = vmatprep.subr.mxu0 0.0
  %877 = vmatpush1.msra.mxu0 0.0
  %878 = vmatprep.subr.mxu0 0.0
  %879 = vmatpush1.msra.mxu0 0.0
  %880 = vmatprep.subr.mxu0 0.0
  %881 = vmatpush1.msra.mxu0 0.0
  %882 = vmatprep.subr.mxu0 0.0
  %883 = vmatpush1.msra.mxu0 0.0
  %884 = vmatprep.subr.mxu0 0.0
  %885 = vmatpush1.msra.mxu0 0.0
  %886 = vmatprep.subr.mxu0 0.0
  %887 = vmatpush1.msra.mxu0 0.0
  %888 = vmatprep.subr.mxu0 0.0
  %889 = vmatpush1.msra.mxu0 0.0
  %890 = vmatprep.subr.mxu0 0.0
  %891 = vmatpush1.msra.mxu0 0.0
  %892 = vmatprep.subr.mxu0 0.0
  %893 = vmatpush1.msra.mxu0 0.0
  %894 = vmatprep.subr.mxu0 0.0
  %895 = vmatpush1.msra.mxu0 0.0
  %896 = vmatprep.subr.mxu0 0.0
  %897 = vmatpush1.msra.mxu0 0.0
  %898 = vmatprep.subr.mxu0 0.0
  %899 = vmatpush1.msra.mxu0 0.0
  %900 = vmatprep.subr.mxu0 0.0
  %901 = vmatpush1.msra.mxu0 0.0
  %902 = vmatprep.subr.mxu0 0.0
  %903 = vmatpush1.msra.mxu0 0.0
  %904 = vmatprep.mubr.f32.mxu0 0.0
  %905 = vmatmul.mubr.f32.gmra.mrb[0].mxu0 %v832
  %v906 = vpop.f32.mrb[0].mxu0
  %v907 = vadd.f32 0.0, %v906
  %v908 = vpop.f32.mrb[0].mxu0
  %909 = vdwg.mxu0
  %v910 = vadd.f32 %v839, %v907
  %v911 = vtanh.pop %v910
  %v912 = vlaneseq
  %v913 = vshrl.u32 %v912, 7
  %v914 = vsub.s32 3, %v913
  %v915 = vrot.slane %v673, %v914
  %v916 = vmul.f32 %v911, %v915
  %v917 = vadd.f32 %v838, %v916
  %v918 = vld [vmem:[%s424] sm:$0xff]
  %919 = vmatprep.subr.mxu0 0.0
  %920 = vmatpush1.msra.mxu0 %v657
  %921 = vmatprep.subr.mxu0 0.0
  %922 = vmatpush1.msra.mxu0 %v658
  %923 = vmatprep.subr.mxu0 0.0
  %924 = vmatpush1.msra.mxu0 %v659
  %925 = vmatprep.subr.mxu0 0.0
  %926 = vmatpush1.msra.mxu0 %v660
  %927 = vmatprep.subr.mxu0 0.0
  %928 = vmatpush1.msra.mxu0 %v661
  %929 = vmatprep.subr.mxu0 0.0
  %930 = vmatpush1.msra.mxu0 %v662
  %931 = vmatprep.subr.mxu0 0.0
  %932 = vmatpush1.msra.mxu0 %v663
  %933 = vmatprep.subr.mxu0 0.0
  %934 = vmatpush1.msra.mxu0 %v664
  %935 = vmatprep.subr.mxu0 0.0
  %936 = vmatpush1.msra.mxu0 %v665
  %937 = vmatprep.subr.mxu0 0.0
  %938 = vmatpush1.msra.mxu0 %v666
  %939 = vmatprep.subr.mxu0 0.0
  %940 = vmatpush1.msra.mxu0 %v667
  %941 = vmatprep.subr.mxu0 0.0
  %942 = vmatpush1.msra.mxu0 %v668
  %943 = vmatprep.subr.mxu0 0.0
  %944 = vmatpush1.msra.mxu0 %v669
  %945 = vmatprep.subr.mxu0 0.0
  %946 = vmatpush1.msra.mxu0 %v670
  %947 = vmatprep.subr.mxu0 0.0
  %948 = vmatpush1.msra.mxu0 %v671
  %949 = vmatprep.subr.mxu0 0.0
  %950 = vmatpush1.msra.mxu0 %v672
  %951 = vmatprep.subr.mxu0 0.0
  %952 = vmatpush1.msra.mxu0 0.0
  %953 = vmatprep.subr.mxu0 0.0
  %954 = vmatpush1.msra.mxu0 0.0
  %955 = vmatprep.subr.mxu0 0.0
  %956 = vmatpush1.msra.mxu0 0.0
  %957 = vmatprep.subr.mxu0 0.0
  %958 = vmatpush1.msra.mxu0 0.0
  %959 = vmatprep.subr.mxu0 0.0
  %960 = vmatpush1.msra.mxu0 0.0
  %961 = vmatprep.subr.mxu0 0.0
  %962 = vmatpush1.msra.mxu0 0.0
  %963 = vmatprep.subr.mxu0 0.0
  %964 = vmatpush1.msra.mxu0 0.0
  %965 = vmatprep.subr.mxu0 0.0
  %966 = vmatpush1.msra.mxu0 0.0
  %967 = vmatprep.subr.mxu0 0.0
  %968 = vmatpush1.msra.mxu0 0.0
  %969 = vmatprep.subr.mxu0 0.0
  %970 = vmatpush1.msra.mxu0 0.0
  %971 = vmatprep.subr.mxu0 0.0
  %972 = vmatpush1.msra.mxu0 0.0
  %973 = vmatprep.subr.mxu0 0.0
  %974 = vmatpush1.msra.mxu0 0.0
  %975 = vmatprep.subr.mxu0 0.0
  %976 = vmatpush1.msra.mxu0 0.0
  %977 = vmatprep.subr.mxu0 0.0
  %978 = vmatpush1.msra.mxu0 0.0
  %979 = vmatprep.subr.mxu0 0.0
  %980 = vmatpush1.msra.mxu0 0.0
  %981 = vmatprep.subr.mxu0 0.0
  %982 = vmatpush1.msra.mxu0 0.0
  %983 = vmatprep.mubr.f32.mxu0 0.0
  %984 = vmatmul.mubr.f32.gmra.mrb[0].mxu0 %v911
  %v985 = vpop.f32.mrb[0].mxu0
  %v986 = vadd.f32 0.0, %v985
  %v987 = vpop.f32.mrb[0].mxu0
  %988 = vdwg.mxu0
  %v989 = vadd.f32 %v918, %v986
  %v990 = vtanh.pop %v989
  %v991 = vlaneseq
  %v992 = vshrl.u32 %v991, 7
  %v993 = vsub.s32 4, %v992
  %v994 = vrot.slane %v673, %v993
  %v995 = vmul.f32 %v990, %v994
  %v996 = vadd.f32 %v917, %v995
  %v997 = vld [vmem:[%s501] sm:$0xff]
  %998 = vmatprep.subr.mxu0 0.0
  %999 = vmatpush1.msra.mxu0 %v657
  %1000 = vmatprep.subr.mxu0 0.0
  %1001 = vmatpush1.msra.mxu0 %v658
  %1002 = vmatprep.subr.mxu0 0.0
  %1003 = vmatpush1.msra.mxu0 %v659
  %1004 = vmatprep.subr.mxu0 0.0
  %1005 = vmatpush1.msra.mxu0 %v660
  %1006 = vmatprep.subr.mxu0 0.0
  %1007 = vmatpush1.msra.mxu0 %v661
  %1008 = vmatprep.subr.mxu0 0.0
  %1009 = vmatpush1.msra.mxu0 %v662
  %1010 = vmatprep.subr.mxu0 0.0
  %1011 = vmatpush1.msra.mxu0 %v663
  %1012 = vmatprep.subr.mxu0 0.0
  %1013 = vmatpush1.msra.mxu0 %v664
  %1014 = vmatprep.subr.mxu0 0.0
  %1015 = vmatpush1.msra.mxu0 %v665
  %1016 = vmatprep.subr.mxu0 0.0
  %1017 = vmatpush1.msra.mxu0 %v666
  %1018 = vmatprep.subr.mxu0 0.0
  %1019 = vmatpush1.msra.mxu0 %v667
  %1020 = vmatprep.subr.mxu0 0.0
  %1021 = vmatpush1.msra.mxu0 %v668
  %1022 = vmatprep.subr.mxu0 0.0
  %1023 = vmatpush1.msra.mxu0 %v669
  %1024 = vmatprep.subr.mxu0 0.0
  %1025 = vmatpush1.msra.mxu0 %v670
  %1026 = vmatprep.subr.mxu0 0.0
  %1027 = vmatpush1.msra.mxu0 %v671
  %1028 = vmatprep.subr.mxu0 0.0
  %1029 = vmatpush1.msra.mxu0 %v672
  %1030 = vmatprep.subr.mxu0 0.0
  %1031 = vmatpush1.msra.mxu0 0.0
  %1032 = vmatprep.subr.mxu0 0.0
  %1033 = vmatpush1.msra.mxu0 0.0
  %1034 = vmatprep.subr.mxu0 0.0
  %1035 = vmatpush1.msra.mxu0 0.0
  %1036 = vmatprep.subr.mxu0 0.0
  %1037 = vmatpush1.msra.mxu0 0.0
  %1038 = vmatprep.subr.mxu0 0.0
  %1039 = vmatpush1.msra.mxu0 0.0
  %1040 = vmatprep.subr.mxu0 0.0
  %1041 = vmatpush1.msra.mxu0 0.0
  %1042 = vmatprep.subr.mxu0 0.0
  %1043 = vmatpush1.msra.mxu0 0.0
  %1044 = vmatprep.subr.mxu0 0.0
  %1045 = vmatpush1.msra.mxu0 0.0
  %1046 = vmatprep.subr.mxu0 0.0
  %1047 = vmatpush1.msra.mxu0 0.0
  %1048 = vmatprep.subr.mxu0 0.0
  %1049 = vmatpush1.msra.mxu0 0.0
  %1050 = vmatprep.subr.mxu0 0.0
  %1051 = vmatpush1.msra.mxu0 0.0
  %1052 = vmatprep.subr.mxu0 0.0
  %1053 = vmatpush1.msra.mxu0 0.0
  %1054 = vmatprep.subr.mxu0 0.0
  %1055 = vmatpush1.msra.mxu0 0.0
  %1056 = vmatprep.subr.mxu0 0.0
  %1057 = vmatpush1.msra.mxu0 0.0
  %1058 = vmatprep.subr.mxu0 0.0
  %1059 = vmatpush1.msra.mxu0 0.0
  %1060 = vmatprep.subr.mxu0 0.0
  %1061 = vmatpush1.msra.mxu0 0.0
  %1062 = vmatprep.mubr.f32.mxu0 0.0
  %1063 = vmatmul.mubr.f32.gmra.mrb[0].mxu0 %v990
  %v1064 = vpop.f32.mrb[0].mxu0
  %v1065 = vadd.f32 0.0, %v1064
  %v1066 = vpop.f32.mrb[0].mxu0
  %1067 = vdwg.mxu0
  %v1068 = vadd.f32 %v997, %v1065
  %v1069 = vtanh.pop %v1068
  %v1070 = vlaneseq
  %v1071 = vshrl.u32 %v1070, 7
  %v1072 = vsub.s32 5, %v1071
  %v1073 = vrot.slane %v673, %v1072
  %v1074 = vmul.f32 %v1069, %v1073
  %v1075 = vadd.f32 %v996, %v1074
  %v1076 = vld [vmem:[%s578] sm:$0xff]
  %1077 = vmatprep.subr.mxu0 0.0
  %1078 = vmatpush1.msra.mxu0 %v657
  %1079 = vmatprep.subr.mxu0 0.0
  %1080 = vmatpush1.msra.mxu0 %v658
  %1081 = vmatprep.subr.mxu0 0.0
  %1082 = vmatpush1.msra.mxu0 %v659
  %1083 = vmatprep.subr.mxu0 0.0
  %1084 = vmatpush1.msra.mxu0 %v660
  %1085 = vmatprep.subr.mxu0 0.0
  %1086 = vmatpush1.msra.mxu0 %v661
  %1087 = vmatprep.subr.mxu0 0.0
  %1088 = vmatpush1.msra.mxu0 %v662
  %1089 = vmatprep.subr.mxu0 0.0
  %1090 = vmatpush1.msra.mxu0 %v663
  %1091 = vmatprep.subr.mxu0 0.0
  %1092 = vmatpush1.msra.mxu0 %v664
  %1093 = vmatprep.subr.mxu0 0.0
  %1094 = vmatpush1.msra.mxu0 %v665
  %1095 = vmatprep.subr.mxu0 0.0
  %1096 = vmatpush1.msra.mxu0 %v666
  %1097 = vmatprep.subr.mxu0 0.0
  %1098 = vmatpush1.msra.mxu0 %v667
  %1099 = vmatprep.subr.mxu0 0.0
  %1100 = vmatpush1.msra.mxu0 %v668
  %1101 = vmatprep.subr.mxu0 0.0
  %1102 = vmatpush1.msra.mxu0 %v669
  %1103 = vmatprep.subr.mxu0 0.0
  %1104 = vmatpush1.msra.mxu0 %v670
  %1105 = vmatprep.subr.mxu0 0.0
  %1106 = vmatpush1.msra.mxu0 %v671
  %1107 = vmatprep.subr.mxu0 0.0
  %1108 = vmatpush1.msra.mxu0 %v672
  %1109 = vmatprep.subr.mxu0 0.0
  %1110 = vmatpush1.msra.mxu0 0.0
  %1111 = vmatprep.subr.mxu0 0.0
  %1112 = vmatpush1.msra.mxu0 0.0
  %1113 = vmatprep.subr.mxu0 0.0
  %1114 = vmatpush1.msra.mxu0 0.0
  %1115 = vmatprep.subr.mxu0 0.0
  %1116 = vmatpush1.msra.mxu0 0.0
  %1117 = vmatprep.subr.mxu0 0.0
  %1118 = vmatpush1.msra.mxu0 0.0
  %1119 = vmatprep.subr.mxu0 0.0
  %1120 = vmatpush1.msra.mxu0 0.0
  %1121 = vmatprep.subr.mxu0 0.0
  %1122 = vmatpush1.msra.mxu0 0.0
  %1123 = vmatprep.subr.mxu0 0.0
  %1124 = vmatpush1.msra.mxu0 0.0
  %1125 = vmatprep.subr.mxu0 0.0
  %1126 = vmatpush1.msra.mxu0 0.0
  %1127 = vmatprep.subr.mxu0 0.0
  %1128 = vmatpush1.msra.mxu0 0.0
  %1129 = vmatprep.subr.mxu0 0.0
  %1130 = vmatpush1.msra.mxu0 0.0
  %1131 = vmatprep.subr.mxu0 0.0
  %1132 = vmatpush1.msra.mxu0 0.0
  %1133 = vmatprep.subr.mxu0 0.0
  %1134 = vmatpush1.msra.mxu0 0.0
  %1135 = vmatprep.subr.mxu0 0.0
  %1136 = vmatpush1.msra.mxu0 0.0
  %1137 = vmatprep.subr.mxu0 0.0
  %1138 = vmatpush1.msra.mxu0 0.0
  %1139 = vmatprep.subr.mxu0 0.0
  %1140 = vmatpush1.msra.mxu0 0.0
  %1141 = vmatprep.mubr.f32.mxu0 0.0
  %1142 = vmatmul.mubr.f32.gmra.mrb[0].mxu0 %v1069
  %v1143 = vpop.f32.mrb[0].mxu0
  %v1144 = vadd.f32 0.0, %v1143
  %v1145 = vpop.f32.mrb[0].mxu0
  %1146 = vdwg.mxu0
  %v1147 = vadd.f32 %v1076, %v1144
  %v1148 = vtanh.pop %v1147
  %v1149 = vlaneseq
  %v1150 = vshrl.u32 %v1149, 7
  %v1151 = vsub.s32 6, %v1150
  %v1152 = vrot.slane %v673, %v1151
  %v1153 = vmul.f32 %v1148, %v1152
  %v1154 = vadd.f32 %v1075, %v1153
  %v1155 = vld [vmem:[%s655] sm:$0xff]
  %1156 = vmatprep.subr.mxu0 0.0
  %1157 = vmatpush1.msra.mxu0 %v657
  %1158 = vmatprep.subr.mxu0 0.0
  %1159 = vmatpush1.msra.mxu0 %v658
  %1160 = vmatprep.subr.mxu0 0.0
  %1161 = vmatpush1.msra.mxu0 %v659
  %1162 = vmatprep.subr.mxu0 0.0
  %1163 = vmatpush1.msra.mxu0 %v660
  %1164 = vmatprep.subr.mxu0 0.0
  %1165 = vmatpush1.msra.mxu0 %v661
  %1166 = vmatprep.subr.mxu0 0.0
  %1167 = vmatpush1.msra.mxu0 %v662
  %1168 = vmatprep.subr.mxu0 0.0
  %1169 = vmatpush1.msra.mxu0 %v663
  %1170 = vmatprep.subr.mxu0 0.0
  %1171 = vmatpush1.msra.mxu0 %v664
  %1172 = vmatprep.subr.mxu0 0.0
  %1173 = vmatpush1.msra.mxu0 %v665
  %1174 = vmatprep.subr.mxu0 0.0
  %1175 = vmatpush1.msra.mxu0 %v666
  %1176 = vmatprep.subr.mxu0 0.0
  %1177 = vmatpush1.msra.mxu0 %v667
  %1178 = vmatprep.subr.mxu0 0.0
  %1179 = vmatpush1.msra.mxu0 %v668
  %1180 = vmatprep.subr.mxu0 0.0
  %1181 = vmatpush1.msra.mxu0 %v669
  %1182 = vmatprep.subr.mxu0 0.0
  %1183 = vmatpush1.msra.mxu0 %v670
  %1184 = vmatprep.subr.mxu0 0.0
  %1185 = vmatpush1.msra.mxu0 %v671
  %1186 = vmatprep.subr.mxu0 0.0
  %1187 = vmatpush1.msra.mxu0 %v672
  %1188 = vmatprep.subr.mxu0 0.0
  %1189 = vmatpush1.msra.mxu0 0.0
  %1190 = vmatprep.subr.mxu0 0.0
  %1191 = vmatpush1.msra.mxu0 0.0
  %1192 = vmatprep.subr.mxu0 0.0
  %1193 = vmatpush1.msra.mxu0 0.0
  %1194 = vmatprep.subr.mxu0 0.0
  %1195 = vmatpush1.msra.mxu0 0.0
  %1196 = vmatprep.subr.mxu0 0.0
  %1197 = vmatpush1.msra.mxu0 0.0
  %1198 = vmatprep.subr.mxu0 0.0
  %1199 = vmatpush1.msra.mxu0 0.0
  %1200 = vmatprep.subr.mxu0 0.0
  %1201 = vmatpush1.msra.mxu0 0.0
  %1202 = vmatprep.subr.mxu0 0.0
  %1203 = vmatpush1.msra.mxu0 0.0
  %1204 = vmatprep.subr.mxu0 0.0
  %1205 = vmatpush1.msra.mxu0 0.0
  %1206 = vmatprep.subr.mxu0 0.0
  %1207 = vmatpush1.msra.mxu0 0.0
  %1208 = vmatprep.subr.mxu0 0.0
  %1209 = vmatpush1.msra.mxu0 0.0
  %1210 = vmatprep.subr.mxu0 0.0
  %1211 = vmatpush1.msra.mxu0 0.0
  %1212 = vmatprep.subr.mxu0 0.0
  %1213 = vmatpush1.msra.mxu0 0.0
  %1214 = vmatprep.subr.mxu0 0.0
  %1215 = vmatpush1.msra.mxu0 0.0
  %1216 = vmatprep.subr.mxu0 0.0
  %1217 = vmatpush1.msra.mxu0 0.0
  %1218 = vmatprep.subr.mxu0 0.0
  %1219 = vmatpush1.msra.mxu0 0.0
  %1220 = vmatprep.mubr.f32.mxu0 0.0
  %1221 = vmatmul.mubr.f32.gmra.mrb[0].mxu0 %v1148
  %v1222 = vpop.f32.mrb[0].mxu0
  %v1223 = vadd.f32 0.0, %v1222
  %v1224 = vpop.f32.mrb[0].mxu0
  %1225 = vdwg.mxu0
  %v1226 = vadd.f32 %v1155, %v1223
  %v1227 = vtanh.pop %v1226
  %v1228 = vlaneseq
  %v1229 = vshrl.u32 %v1228, 7
  %v1230 = vsub.s32 7, %v1229
  %v1231 = vrot.slane %v673, %v1230
  %v1232 = vmul.f32 %v1227, %v1231
  %v1233 = vadd.f32 %v1154, %v1232
  %v1234 = vld [vmem:[%s5] sm:$0xff]
  %v1235 = vld [vmem:[%s5 + $0x8] sm:$0xff]
  %v1236 = vld [vmem:[%s5 + $0x10] sm:$0xff]
  %v1237 = vld [vmem:[%s5 + $0x18] sm:$0xff]
  %v1238 = vld [vmem:[%s5 + $0x20] sm:$0xff]
  %v1239 = vld [vmem:[%s5 + $0x28] sm:$0xff]
  %v1240 = vld [vmem:[%s5 + $0x30] sm:$0xff]
  %v1241 = vld [vmem:[%s5 + $0x38] sm:$0xff]
  %v1242 = vld [vmem:[%s5 + $0x40] sm:$0xff]
  %v1243 = vld [vmem:[%s5 + $0x48] sm:$0xff]
  %v1244 = vld [vmem:[%s5 + $0x50] sm:$0xff]
  %v1245 = vld [vmem:[%s5 + $0x58] sm:$0xff]
  %v1246 = vld [vmem:[%s5 + $0x60] sm:$0xff]
  %v1247 = vld [vmem:[%s5 + $0x68] sm:$0xff]
  %v1248 = vld [vmem:[%s5 + $0x70] sm:$0xff]
  %v1249 = vld [vmem:[%s5 + $0x78] sm:$0xff]
  %s1250 = sld [smem:[#allocation3]]
  %v1251 = vstv %s1250
  %1252 = vmatprep.subr.mxu0 0.0
  %1253 = vmatpush1.msra.mxu0 %v1234
  %1254 = vmatprep.subr.mxu0 0.0
  %1255 = vmatpush1.msra.mxu0 %v1235
  %1256 = vmatprep.subr.mxu0 0.0
  %1257 = vmatpush1.msra.mxu0 %v1236
  %1258 = vmatprep.subr.mxu0 0.0
  %1259 = vmatpush1.msra.mxu0 %v1237
  %1260 = vmatprep.subr.mxu0 0.0
  %1261 = vmatpush1.msra.mxu0 %v1238
  %1262 = vmatprep.subr.mxu0 0.0
  %1263 = vmatpush1.msra.mxu0 %v1239
  %1264 = vmatprep.subr.mxu0 0.0
  %1265 = vmatpush1.msra.mxu0 %v1240
  %1266 = vmatprep.subr.mxu0 0.0
  %1267 = vmatpush1.msra.mxu0 %v1241
  %1268 = vmatprep.subr.mxu0 0.0
  %1269 = vmatpush1.msra.mxu0 %v1242
  %1270 = vmatprep.subr.mxu0 0.0
  %1271 = vmatpush1.msra.mxu0 %v1243
  %1272 = vmatprep.subr.mxu0 0.0
  %1273 = vmatpush1.msra.mxu0 %v1244
  %1274 = vmatprep.subr.mxu0 0.0
  %1275 = vmatpush1.msra.mxu0 %v1245
  %1276 = vmatprep.subr.mxu0 0.0
  %1277 = vmatpush1.msra.mxu0 %v1246
  %1278 = vmatprep.subr.mxu0 0.0
  %1279 = vmatpush1.msra.mxu0 %v1247
  %1280 = vmatprep.subr.mxu0 0.0
  %1281 = vmatpush1.msra.mxu0 %v1248
  %1282 = vmatprep.subr.mxu0 0.0
  %1283 = vmatpush1.msra.mxu0 %v1249
  %1284 = vmatprep.subr.mxu0 0.0
  %1285 = vmatpush1.msra.mxu0 0.0
  %1286 = vmatprep.subr.mxu0 0.0
  %1287 = vmatpush1.msra.mxu0 0.0
  %1288 = vmatprep.subr.mxu0 0.0
  %1289 = vmatpush1.msra.mxu0 0.0
  %1290 = vmatprep.subr.mxu0 0.0
  %1291 = vmatpush1.msra.mxu0 0.0
  %1292 = vmatprep.subr.mxu0 0.0
  %1293 = vmatpush1.msra.mxu0 0.0
  %1294 = vmatprep.subr.mxu0 0.0
  %1295 = vmatpush1.msra.mxu0 0.0
  %1296 = vmatprep.subr.mxu0 0.0
  %1297 = vmatpush1.msra.mxu0 0.0
  %1298 = vmatprep.subr.mxu0 0.0
  %1299 = vmatpush1.msra.mxu0 0.0
  %1300 = vmatprep.subr.mxu0 0.0
  %1301 = vmatpush1.msra.mxu0 0.0
  %1302 = vmatprep.subr.mxu0 0.0
  %1303 = vmatpush1.msra.mxu0 0.0
  %1304 = vmatprep.subr.mxu0 0.0
  %1305 = vmatpush1.msra.mxu0 0.0
  %1306 = vmatprep.subr.mxu0 0.0
  %1307 = vmatpush1.msra.mxu0 0.0
  %1308 = vmatprep.subr.mxu0 0.0
  %1309 = vmatpush1.msra.mxu0 0.0
  %1310 = vmatprep.subr.mxu0 0.0
  %1311 = vmatpush1.msra.mxu0 0.0
  %1312 = vmatprep.subr.mxu0 0.0
  %1313 = vmatpush1.msra.mxu0 0.0
  %1314 = vmatprep.subr.mxu0 0.0
  %1315 = vmatpush1.msra.mxu0 0.0
  %1316 = vmatprep.mubr.f32.mxu0 0.0
  %1317 = vmatmul.mubr.f32.gmra.mrb[0].mxu0 %v1233
  %v1318 = vpop.f32.mrb[0].mxu0
  %v1319 = vadd.f32 %v1251, %v1318
  %v1320 = vpop.f32.mrb[0].mxu0
  %1321 = vdwg.mxu0
  %v1322 = vxor.u32 %v1319, 2147483648
  %v1323 = vmul.f32 %v1322, 1.442695
  %v1324 = vpow.pop %v1323
  %v1325 = vadd.f32 %v1324, 1.0
  %v1326 = vrcp.pop %v1325
  %v1327 = vmul.f32 1.0, %v1326
  %vm1328 = vcmask 31744
  %1329 = vst.msk [vmem:[%s7] sm:$0xff] %vm1328, %v1327
  // Predicated region
  $region30: #{rnnnet_forward.1} parent=0 // pred_check
    _
  $region31: #{rnnnet_forward.1} parent=0 // pred_check_branch
    %1331 = sbr.rel (0) target = $region33
  $region32: #{rnnnet_forward.1} parent=0 // pred_region
    _
  $region33: #{rnnnet_forward.1} parent=0 // pred_fallthru
    _
  // Predicated region
  $region34: #{rnnnet_forward.1} parent=0 // pred_check
    _
  $region35: #{rnnnet_forward.1} parent=0 // pred_check_branch
    %1333 = sbr.rel (0) target = $region37
  $region36: #{rnnnet_forward.1} parent=0 // pred_region
    _
  $region37: #{rnnnet_forward.1} parent=0 // pred_fallthru
    _

</llo_original>
